<compile_context>
chip_gen: v6e
topology: v6e:2x2x1
jax: 0.10.0
libtpu: 0.0.40
codegen_flags: <defaults>
</compile_context>

<pallas_src>
import functools

import jax
import jax.numpy as jnp
from jax import lax
from jax.experimental import pallas as pl
from jax.experimental.pallas import tpu as pltpu


# ----------------------------------------------------------------------------
# Pallas kernel: LSTM (last hidden state) + LayerNorm + mean over K
#                + fused fc_mu/fc_logvar + reparameterization.
# ----------------------------------------------------------------------------
def charnet_kernel(emb_ref,      # (T*N, D)  compute dtype, rows t-major (row = t*N + n)
                   w_ih_ref,     # (D, 4H)   compute dtype, gate order [i, f, o, g]
                   w_hh_ref,     # (H, 4H)   compute dtype, gate order [i, f, o, g]
                   b_ref,        # (1, 4H)   f32, b_ih + b_hh, order [i, f, o, g]
                   act_ref,      # (2, 4H)   f32, row0 = scale, row1 = shift
                   gamma_ref,    # (1, H)    f32, LayerNorm weight
                   beta_ref,     # (1, H)    f32, LayerNorm bias
                   w_head_ref,   # (H, 2Z)   compute dtype, [w_mu | w_lv]
                   b_head_ref,   # (1, 2Z)   f32, [b_mu | b_lv]
                   avg_ref,      # (B, N)    compute dtype, mean-over-K matrix
                   eps_ref,      # (B, Z)    f32, N(0,1) noise for reparam
                   z_ref,        # out (B, Z)   f32
                   head_ref,     # out (B, 2Z)  f32 = [mu | logvar]
                   pre_ref,      # scratch VMEM (T*N, 4H) f32
                   *, n_steps, n_seq):
    T, N = n_steps, n_seq
    H = gamma_ref.shape[1]
    Z = eps_ref.shape[1]

    # ---- Hoisted input projection: one MXU matmul covers every time step. ----
    # Parked in VMEM scratch so the unrolled recurrence only keeps one (N,4H)
    # slab live per step (bounds vreg live ranges).
    pre_ref[...] = jnp.dot(emb_ref[...], w_ih_ref[...],
                           preferred_element_type=jnp.float32) + b_ref[...]

    w_hh = w_hh_ref[...]                       # packed (H, 4H) recurrent RHS
    cdt = w_hh.dtype
    scale = act_ref[0:1, :]                    # 0.5 on i,f,o lanes; 1.0 on g lanes
    shift = act_ref[1:2, :]                    # 0.5 on i,f,o lanes; 0.0 on g lanes

    # ---- Recurrence: fully unrolled (T static & small); h, c live in vregs. ----
    h = jnp.zeros((N, H), jnp.float32)
    c = jnp.zeros((N, H), jnp.float32)
    for t in range(T):
        gates = pre_ref[t * N:(t + 1) * N, :] + jnp.dot(
            h.astype(cdt), w_hh, preferred_element_type=jnp.float32)     # (N, 4H)
        # One EUP pass for all four gates:
        #   i,f,o lanes: sigmoid(x) = 0.5*tanh(0.5x) + 0.5 ; g lanes: tanh(x).
        act = jnp.tanh(gates * scale) * scale + shift                    # (N, 4H)
        c = act[:, H:2 * H] * c + act[:, 0:H] * act[:, 3 * H:4 * H]      # f*c + i*g
        h = act[:, 2 * H:3 * H] * jnp.tanh(c)                            # o*tanh(c)

    # Dropout: eval-mode identity.
    # ---- Single-pass LayerNorm over H (eps = 1e-5, PyTorch default). ----
    # Safe here: LSTM h is bounded in (-1, 1); switch to two-pass if reused.
    s = jnp.sum(h, axis=-1, keepdims=True)
    ss = jnp.sum(h * h, axis=-1, keepdims=True)
    mean = s * (1.0 / H)
    var = ss * (1.0 / H) - mean * mean
    h_norm = (h - mean) * lax.rsqrt(var + 1e-5)
    h_norm = h_norm * gamma_ref[...] + beta_ref[...]                     # (N, H)

    # ---- Mean over K via precomputed averaging matrix (MXU). ----
    chars = jnp.dot(avg_ref[...], h_norm.astype(cdt),
                    preferred_element_type=jnp.float32)                  # (B, H)

    # ---- Fused mu / logvar heads: one matmul; two direct output stores. ----
    head = jnp.dot(chars.astype(cdt), w_head_ref[...],
                   preferred_element_type=jnp.float32) + b_head_ref[...] # (B, 2Z)
    mu = head[:, :Z]
    lv = head[:, Z:]
    z_ref[...] = mu + eps_ref[...] * jnp.exp(0.5 * lv)
    head_ref[...] = head


# ----------------------------------------------------------------------------
# Wrapper
# ----------------------------------------------------------------------------
def character_net_forward(support_trajs, params, eps, *,
                          compute_dtype=jnp.bfloat16):
    """support_trajs: (B, K, T) int32; returns (z, mu, logvar) each (B, Z)."""
    B, K, T = support_trajs.shape
    N = B * K
    node_emb = params["node_embeddings"]          # (num_nodes, D)
    H = params["w_hh"].shape[0]
    Z = params["w_mu"].shape[1]

    # Embedding gather producing the time-major layout directly (row = t*N + n).
    idx_tm = support_trajs.reshape(N, T).T.reshape(T * N)                # (T*N,)
    emb_tm = jnp.take(node_emb, idx_tm, axis=0).astype(compute_dtype)    # (T*N, D)

    # Reorder gate lanes from stored [i, f, g, o] to [i, f, o, g] so the three
    # sigmoid gates are lane-contiguous (single fused activation per step).
    perm = jnp.concatenate([jnp.arange(0, 2 * H),
                            jnp.arange(3 * H, 4 * H),
                            jnp.arange(2 * H, 3 * H)])
    w_ih = params["w_ih"][:, perm].astype(compute_dtype)                 # (D, 4H)
    w_hh = params["w_hh"][:, perm].astype(compute_dtype)                 # (H, 4H)
    b_g = params["b_gates"][:, perm].astype(jnp.float32)                 # (1, 4H)

    # Lane-dependent activation constants: tanh(x*scale)*scale + shift gives
    # sigmoid on i,f,o lanes and tanh on g lanes.
    scale = jnp.concatenate([jnp.full((3 * H,), 0.5, jnp.float32),
                             jnp.ones((H,), jnp.float32)])
    shift = jnp.concatenate([jnp.full((3 * H,), 0.5, jnp.float32),
                             jnp.zeros((H,), jnp.float32)])
    act_consts = jnp.stack([scale, shift], axis=0)                       # (2, 4H)

    # Fused FC heads.
    w_head = jnp.concatenate([params["w_mu"], params["w_lv"]],
                             axis=1).astype(compute_dtype)               # (H, 2Z)
    b_head = jnp.concatenate([params["b_mu"], params["b_lv"]],
                             axis=1).astype(jnp.float32)                 # (1, 2Z)

    # Mean-over-K averaging matrix (rows are b-major: n = b*K + k).
    row = jnp.arange(B)[:, None]
    col = jnp.arange(N)[None, :]
    avg_mat = jnp.where(col // K == row, 1.0 / K, 0.0).astype(compute_dtype)

    vmem = functools.partial(pl.BlockSpec, memory_space=pltpu.MemorySpace.VMEM)
    kernel = functools.partial(charnet_kernel, n_steps=T, n_seq=N)

    z, head = pl.pallas_call(
        kernel,
        out_shape=(jax.ShapeDtypeStruct((B, Z), jnp.float32),
                   jax.ShapeDtypeStruct((B, 2 * Z), jnp.float32)),
        in_specs=[vmem()] * 11,
        out_specs=(vmem(), vmem()),
        scratch_shapes=[pltpu.VMEM((T * N, 4 * H), jnp.float32)],
    )(emb_tm, w_ih, w_hh, b_g, act_consts,
      params["ln_gamma"].astype(jnp.float32),
      params["ln_beta"].astype(jnp.float32),
      w_head, b_head, avg_mat, eps.astype(jnp.float32))

    mu = head[:, :Z]
    logvar = head[:, Z:]
    return z, mu, logvar


# ----------------------------------------------------------------------------
# Pure-JAX reference for verification
# ----------------------------------------------------------------------------
def reference_forward(support_trajs, params, eps):
    B, K, T = support_trajs.shape
    N = B * K
    node_emb = params["node_embeddings"]
    H = params["w_hh"].shape[0]
    flat = support_trajs.reshape(N, T)
    emb_tm = jnp.transpose(jnp.take(node_emb, flat, axis=0), (1, 0, 2))

    def step(carry, x_t):
        h, c = carry
        gates = x_t @ params["w_ih"] + h @ params["w_hh"] + params["b_gates"][0]
        i = jax.nn.sigmoid(gates[:, :H])
        f = jax.nn.sigmoid(gates[:, H:2 * H])
        g = jnp.tanh(gates[:, 2 * H:3 * H])
        o = jax.nn.sigmoid(gates[:, 3 * H:])
        c = f * c + i * g
        h = o * jnp.tanh(c)
        return (h, c), None

    init = (jnp.zeros((N, H), jnp.float32), jnp.zeros((N, H), jnp.float32))
    (h_n, _), _ = lax.scan(step, init, emb_tm)

    mean = h_n.mean(-1, keepdims=True)
    var = ((h_n - mean) ** 2).mean(-1, keepdims=True)
    h_norm = (h_n - mean) / jnp.sqrt(var + 1e-5)
    h_norm = h_norm * params["ln_gamma"][0] + params["ln_beta"][0]

    chars = h_norm.reshape(B, K, H).mean(axis=1)
    mu = chars @ params["w_mu"] + params["b_mu"][0]
    lv = chars @ params["w_lv"] + params["b_lv"][0]
    z = mu + eps * jnp.exp(0.5 * lv)
    return z, mu, lv


# ----------------------------------------------------------------------------
# Main
# ----------------------------------------------------------------------------
if __name__ == "__main__":
    # Small shapes consistent with the module's forward.
    B, K, T = 2, 4, 8          # CharacterNet(K=4, T_sup=8)
    num_nodes, d_emb = 32, 16
    h_lstm, z_dim = 32, 16

    key = jax.random.PRNGKey(0)
    keys = jax.random.split(key, 12)

    params = {
        "node_embeddings": jax.random.normal(keys[0], (num_nodes, d_emb),
                                             jnp.float32) * 0.5,
        # LSTM weights (stored transposed vs. torch: (in, 4H)); gate order i,f,g,o
        "w_ih": jax.random.normal(keys[1], (d_emb, 4 * h_lstm), jnp.float32) * 0.1,
        "w_hh": jax.random.normal(keys[2], (h_lstm, 4 * h_lstm), jnp.float32) * 0.1,
        # b_ih + b_hh merged
        "b_gates": jax.random.normal(keys[3], (1, 4 * h_lstm), jnp.float32) * 0.1,
        "ln_gamma": jnp.ones((1, h_lstm), jnp.float32),
        "ln_beta": jnp.zeros((1, h_lstm), jnp.float32),
        "w_mu": jax.random.normal(keys[4], (h_lstm, z_dim), jnp.float32) * 0.1,
        "b_mu": jax.random.normal(keys[5], (1, z_dim), jnp.float32) * 0.1,
        "w_lv": jax.random.normal(keys[6], (h_lstm, z_dim), jnp.float32) * 0.1,
        "b_lv": jax.random.normal(keys[7], (1, z_dim), jnp.float32) * 0.1,
    }

    support_trajs = jax.random.randint(keys[8], (B, K, T), 0, num_nodes,
                                       dtype=jnp.int32)
    eps = jax.random.normal(keys[9], (B, z_dim), jnp.float32)

    fwd_f32 = jax.jit(functools.partial(character_net_forward,
                                        compute_dtype=jnp.float32))
    fwd_bf16 = jax.jit(functools.partial(character_net_forward,
                                         compute_dtype=jnp.bfloat16))

    # Exact-semantics path (f32 MXU operands) — strict check.
    z, mu, logvar = fwd_f32(support_trajs, params, eps)
    jax.block_until_ready((z, mu, logvar))

    # Performance path (bf16 MXU operands, f32 accumulation) — loose check.
    z16, mu16, lv16 = fwd_bf16(support_trajs, params, eps)
    jax.block_until_ready((z16, mu16, lv16))

    z_r, mu_r, lv_r = reference_forward(support_trajs, params, eps)
    assert jnp.allclose(z, z_r, atol=1e-4, rtol=1e-4)
    assert jnp.allclose(mu, mu_r, atol=1e-4, rtol=1e-4)
    assert jnp.allclose(logvar, lv_r, atol=1e-4, rtol=1e-4)
    assert jnp.allclose(z16, z_r, atol=2e-1, rtol=2e-1)
    assert jnp.allclose(mu16, mu_r, atol=2e-1, rtol=2e-1)
    assert jnp.allclose(lv16, lv_r, atol=2e-1, rtol=2e-1)

    print("KERNEL_OK")
</pallas_src>

<mosaic_0001>
module attributes {stable_mosaic.version = 11 : i64} {
  func.func @charnet_kernel(%arg0: memref<64x16xf32, #tpu.memory_space<vmem>>, %arg1: memref<16x128xf32, #tpu.memory_space<vmem>>, %arg2: memref<32x128xf32, #tpu.memory_space<vmem>>, %arg3: memref<1x128xf32, #tpu.memory_space<vmem>>, %arg4: memref<2x128xf32, #tpu.memory_space<vmem>>, %arg5: memref<1x32xf32, #tpu.memory_space<vmem>>, %arg6: memref<1x32xf32, #tpu.memory_space<vmem>>, %arg7: memref<32x32xf32, #tpu.memory_space<vmem>>, %arg8: memref<1x32xf32, #tpu.memory_space<vmem>>, %arg9: memref<2x8xf32, #tpu.memory_space<vmem>>, %arg10: memref<2x16xf32, #tpu.memory_space<vmem>>, %arg11: memref<2x16xf32, #tpu.memory_space<vmem>>, %arg12: memref<2x32xf32, #tpu.memory_space<vmem>>, %arg13: memref<64x128xf32, #tpu.memory_space<vmem>>) attributes {dimension_semantics = [], scalar_prefetch = 0 : i64, scratch_operands = 1 : i64, tpu.core_type = #tpu.core_type<tc>} {
    %c0 = arith.constant 0 : index
    %c0_0 = arith.constant 0 : index
    %0 = vector.load %arg0[%c0, %c0_0] : memref<64x16xf32, #tpu.memory_space<vmem>>, vector<64x16xf32>
    %c0_1 = arith.constant 0 : index
    %c0_2 = arith.constant 0 : index
    %1 = vector.load %arg1[%c0_1, %c0_2] : memref<16x128xf32, #tpu.memory_space<vmem>>, vector<16x128xf32>
    %cst = arith.constant dense<0.000000e+00> : vector<64x128xf32>
    %2 = tpu.matmul %0, %1, %cst {dimension_numbers = #tpu.dot_dimension_numbers<[1], [0], [0], [1], [0, 0, 1, 1], [], []>} : vector<64x16xf32>, vector<16x128xf32>, vector<64x128xf32> -> vector<64x128xf32>
    %c0_3 = arith.constant 0 : index
    %c0_4 = arith.constant 0 : index
    %3 = vector.load %arg3[%c0_3, %c0_4] : memref<1x128xf32, #tpu.memory_space<vmem>>, vector<1x128xf32>
    %4 = vector.broadcast %3 : vector<1x128xf32> to vector<64x128xf32>
    %5 = arith.addf %2, %4 : vector<64x128xf32>
    %c0_5 = arith.constant 0 : index
    %c0_6 = arith.constant 0 : index
    %6 = vector.load %arg13[%c0_5, %c0_6] : memref<64x128xf32, #tpu.memory_space<vmem>>, vector<64x128xf32>
    tpu.vector_store %arg13[%c0_5, %c0_6], %5 {strides = array<i32>} : memref<64x128xf32, #tpu.memory_space<vmem>>, vector<64x128xf32>,
    %c0_7 = arith.constant 0 : index
    %c0_8 = arith.constant 0 : index
    %7 = vector.load %arg2[%c0_7, %c0_8] : memref<32x128xf32, #tpu.memory_space<vmem>>, vector<32x128xf32>
    %c0_9 = arith.constant 0 : index
    %c0_10 = arith.constant 0 : index
    %8 = vector.load %arg4[%c0_9, %c0_10] : memref<2x128xf32, #tpu.memory_space<vmem>>, vector<1x128xf32>
    %c1 = arith.constant 1 : index
    %c0_11 = arith.constant 0 : index
    %9 = vector.load %arg4[%c1, %c0_11] : memref<2x128xf32, #tpu.memory_space<vmem>>, vector<1x128xf32>
    %cst_12 = arith.constant 0.000000e+00 : f32
    %10 = vector.broadcast %cst_12 : f32 to vector<8x32xf32>
    %cst_13 = arith.constant 0.000000e+00 : f32
    %11 = vector.broadcast %cst_13 : f32 to vector<8x32xf32>
    %c0_14 = arith.constant 0 : index
    %c0_15 = arith.constant 0 : index
    %12 = vector.load %arg13[%c0_14, %c0_15] : memref<64x128xf32, #tpu.memory_space<vmem>>, vector<8x128xf32>
    %cst_16 = arith.constant dense<0.000000e+00> : vector<8x128xf32>
    %13 = tpu.matmul %10, %7, %cst_16 {dimension_numbers = #tpu.dot_dimension_numbers<[1], [0], [0], [1], [0, 0, 1, 1], [], []>} : vector<8x32xf32>, vector<32x128xf32>, vector<8x128xf32> -> vector<8x128xf32>
    %14 = arith.addf %12, %13 : vector<8x128xf32>
    %15 = vector.broadcast %8 : vector<1x128xf32> to vector<8x128xf32>
    %16 = arith.mulf %14, %15 : vector<8x128xf32>
    %17 = math.tanh %16 : vector<8x128xf32>
    %18 = vector.broadcast %8 : vector<1x128xf32> to vector<8x128xf32>
    %19 = arith.mulf %17, %18 : vector<8x128xf32>
    %20 = vector.broadcast %9 : vector<1x128xf32> to vector<8x128xf32>
    %21 = arith.addf %19, %20 : vector<8x128xf32>
    %22 = vector.extract_strided_slice %21 {offsets = [0, 32], sizes = [8, 32], strides = [1, 1]} : vector<8x128xf32> to vector<8x32xf32>
    %23 = arith.mulf %22, %11 : vector<8x32xf32>
    %24 = vector.extract_strided_slice %21 {offsets = [0, 0], sizes = [8, 32], strides = [1, 1]} : vector<8x128xf32> to vector<8x32xf32>
    %25 = vector.extract_strided_slice %21 {offsets = [0, 96], sizes = [8, 32], strides = [1, 1]} : vector<8x128xf32> to vector<8x32xf32>
    %26 = arith.mulf %24, %25 : vector<8x32xf32>
    %27 = arith.addf %23, %26 : vector<8x32xf32>
    %28 = vector.extract_strided_slice %21 {offsets = [0, 64], sizes = [8, 32], strides = [1, 1]} : vector<8x128xf32> to vector<8x32xf32>
    %29 = math.tanh %27 : vector<8x32xf32>
    %30 = arith.mulf %28, %29 : vector<8x32xf32>
    %c8 = arith.constant 8 : index
    %c0_17 = arith.constant 0 : index
    %31 = vector.load %arg13[%c8, %c0_17] : memref<64x128xf32, #tpu.memory_space<vmem>>, vector<8x128xf32>
    %cst_18 = arith.constant dense<0.000000e+00> : vector<8x128xf32>
    %32 = tpu.matmul %30, %7, %cst_18 {dimension_numbers = #tpu.dot_dimension_numbers<[1], [0], [0], [1], [0, 0, 1, 1], [], []>} : vector<8x32xf32>, vector<32x128xf32>, vector<8x128xf32> -> vector<8x128xf32>
    %33 = arith.addf %31, %32 : vector<8x128xf32>
    %34 = vector.broadcast %8 : vector<1x128xf32> to vector<8x128xf32>
    %35 = arith.mulf %33, %34 : vector<8x128xf32>
    %36 = math.tanh %35 : vector<8x128xf32>
    %37 = vector.broadcast %8 : vector<1x128xf32> to vector<8x128xf32>
    %38 = arith.mulf %36, %37 : vector<8x128xf32>
    %39 = vector.broadcast %9 : vector<1x128xf32> to vector<8x128xf32>
    %40 = arith.addf %38, %39 : vector<8x128xf32>
    %41 = vector.extract_strided_slice %40 {offsets = [0, 32], sizes = [8, 32], strides = [1, 1]} : vector<8x128xf32> to vector<8x32xf32>
    %42 = arith.mulf %41, %27 : vector<8x32xf32>
    %43 = vector.extract_strided_slice %40 {offsets = [0, 0], sizes = [8, 32], strides = [1, 1]} : vector<8x128xf32> to vector<8x32xf32>
    %44 = vector.extract_strided_slice %40 {offsets = [0, 96], sizes = [8, 32], strides = [1, 1]} : vector<8x128xf32> to vector<8x32xf32>
    %45 = arith.mulf %43, %44 : vector<8x32xf32>
    %46 = arith.addf %42, %45 : vector<8x32xf32>
    %47 = vector.extract_strided_slice %40 {offsets = [0, 64], sizes = [8, 32], strides = [1, 1]} : vector<8x128xf32> to vector<8x32xf32>
    %48 = math.tanh %46 : vector<8x32xf32>
    %49 = arith.mulf %47, %48 : vector<8x32xf32>
    %c16 = arith.constant 16 : index
    %c0_19 = arith.constant 0 : index
    %50 = vector.load %arg13[%c16, %c0_19] : memref<64x128xf32, #tpu.memory_space<vmem>>, vector<8x128xf32>
    %cst_20 = arith.constant dense<0.000000e+00> : vector<8x128xf32>
    %51 = tpu.matmul %49, %7, %cst_20 {dimension_numbers = #tpu.dot_dimension_numbers<[1], [0], [0], [1], [0, 0, 1, 1], [], []>} : vector<8x32xf32>, vector<32x128xf32>, vector<8x128xf32> -> vector<8x128xf32>
    %52 = arith.addf %50, %51 : vector<8x128xf32>
    %53 = vector.broadcast %8 : vector<1x128xf32> to vector<8x128xf32>
    %54 = arith.mulf %52, %53 : vector<8x128xf32>
    %55 = math.tanh %54 : vector<8x128xf32>
    %56 = vector.broadcast %8 : vector<1x128xf32> to vector<8x128xf32>
    %57 = arith.mulf %55, %56 : vector<8x128xf32>
    %58 = vector.broadcast %9 : vector<1x128xf32> to vector<8x128xf32>
    %59 = arith.addf %57, %58 : vector<8x128xf32>
    %60 = vector.extract_strided_slice %59 {offsets = [0, 32], sizes = [8, 32], strides = [1, 1]} : vector<8x128xf32> to vector<8x32xf32>
    %61 = arith.mulf %60, %46 : vector<8x32xf32>
    %62 = vector.extract_strided_slice %59 {offsets = [0, 0], sizes = [8, 32], strides = [1, 1]} : vector<8x128xf32> to vector<8x32xf32>
    %63 = vector.extract_strided_slice %59 {offsets = [0, 96], sizes = [8, 32], strides = [1, 1]} : vector<8x128xf32> to vector<8x32xf32>
    %64 = arith.mulf %62, %63 : vector<8x32xf32>
    %65 = arith.addf %61, %64 : vector<8x32xf32>
    %66 = vector.extract_strided_slice %59 {offsets = [0, 64], sizes = [8, 32], strides = [1, 1]} : vector<8x128xf32> to vector<8x32xf32>
    %67 = math.tanh %65 : vector<8x32xf32>
    %68 = arith.mulf %66, %67 : vector<8x32xf32>
    %c24 = arith.constant 24 : index
    %c0_21 = arith.constant 0 : index
    %69 = vector.load %arg13[%c24, %c0_21] : memref<64x128xf32, #tpu.memory_space<vmem>>, vector<8x128xf32>
    %cst_22 = arith.constant dense<0.000000e+00> : vector<8x128xf32>
    %70 = tpu.matmul %68, %7, %cst_22 {dimension_numbers = #tpu.dot_dimension_numbers<[1], [0], [0], [1], [0, 0, 1, 1], [], []>} : vector<8x32xf32>, vector<32x128xf32>, vector<8x128xf32> -> vector<8x128xf32>
    %71 = arith.addf %69, %70 : vector<8x128xf32>
    %72 = vector.broadcast %8 : vector<1x128xf32> to vector<8x128xf32>
    %73 = arith.mulf %71, %72 : vector<8x128xf32>
    %74 = math.tanh %73 : vector<8x128xf32>
    %75 = vector.broadcast %8 : vector<1x128xf32> to vector<8x128xf32>
    %76 = arith.mulf %74, %75 : vector<8x128xf32>
    %77 = vector.broadcast %9 : vector<1x128xf32> to vector<8x128xf32>
    %78 = arith.addf %76, %77 : vector<8x128xf32>
    %79 = vector.extract_strided_slice %78 {offsets = [0, 32], sizes = [8, 32], strides = [1, 1]} : vector<8x128xf32> to vector<8x32xf32>
    %80 = arith.mulf %79, %65 : vector<8x32xf32>
    %81 = vector.extract_strided_slice %78 {offsets = [0, 0], sizes = [8, 32], strides = [1, 1]} : vector<8x128xf32> to vector<8x32xf32>
    %82 = vector.extract_strided_slice %78 {offsets = [0, 96], sizes = [8, 32], strides = [1, 1]} : vector<8x128xf32> to vector<8x32xf32>
    %83 = arith.mulf %81, %82 : vector<8x32xf32>
    %84 = arith.addf %80, %83 : vector<8x32xf32>
    %85 = vector.extract_strided_slice %78 {offsets = [0, 64], sizes = [8, 32], strides = [1, 1]} : vector<8x128xf32> to vector<8x32xf32>
    %86 = math.tanh %84 : vector<8x32xf32>
    %87 = arith.mulf %85, %86 : vector<8x32xf32>
    %c32 = arith.constant 32 : index
    %c0_23 = arith.constant 0 : index
    %88 = vector.load %arg13[%c32, %c0_23] : memref<64x128xf32, #tpu.memory_space<vmem>>, vector<8x128xf32>
    %cst_24 = arith.constant dense<0.000000e+00> : vector<8x128xf32>
    %89 = tpu.matmul %87, %7, %cst_24 {dimension_numbers = #tpu.dot_dimension_numbers<[1], [0], [0], [1], [0, 0, 1, 1], [], []>} : vector<8x32xf32>, vector<32x128xf32>, vector<8x128xf32> -> vector<8x128xf32>
    %90 = arith.addf %88, %89 : vector<8x128xf32>
    %91 = vector.broadcast %8 : vector<1x128xf32> to vector<8x128xf32>
    %92 = arith.mulf %90, %91 : vector<8x128xf32>
    %93 = math.tanh %92 : vector<8x128xf32>
    %94 = vector.broadcast %8 : vector<1x128xf32> to vector<8x128xf32>
    %95 = arith.mulf %93, %94 : vector<8x128xf32>
    %96 = vector.broadcast %9 : vector<1x128xf32> to vector<8x128xf32>
    %97 = arith.addf %95, %96 : vector<8x128xf32>
    %98 = vector.extract_strided_slice %97 {offsets = [0, 32], sizes = [8, 32], strides = [1, 1]} : vector<8x128xf32> to vector<8x32xf32>
    %99 = arith.mulf %98, %84 : vector<8x32xf32>
    %100 = vector.extract_strided_slice %97 {offsets = [0, 0], sizes = [8, 32], strides = [1, 1]} : vector<8x128xf32> to vector<8x32xf32>
    %101 = vector.extract_strided_slice %97 {offsets = [0, 96], sizes = [8, 32], strides = [1, 1]} : vector<8x128xf32> to vector<8x32xf32>
    %102 = arith.mulf %100, %101 : vector<8x32xf32>
    %103 = arith.addf %99, %102 : vector<8x32xf32>
    %104 = vector.extract_strided_slice %97 {offsets = [0, 64], sizes = [8, 32], strides = [1, 1]} : vector<8x128xf32> to vector<8x32xf32>
    %105 = math.tanh %103 : vector<8x32xf32>
    %106 = arith.mulf %104, %105 : vector<8x32xf32>
    %c40 = arith.constant 40 : index
    %c0_25 = arith.constant 0 : index
    %107 = vector.load %arg13[%c40, %c0_25] : memref<64x128xf32, #tpu.memory_space<vmem>>, vector<8x128xf32>
    %cst_26 = arith.constant dense<0.000000e+00> : vector<8x128xf32>
    %108 = tpu.matmul %106, %7, %cst_26 {dimension_numbers = #tpu.dot_dimension_numbers<[1], [0], [0], [1], [0, 0, 1, 1], [], []>} : vector<8x32xf32>, vector<32x128xf32>, vector<8x128xf32> -> vector<8x128xf32>
    %109 = arith.addf %107, %108 : vector<8x128xf32>
    %110 = vector.broadcast %8 : vector<1x128xf32> to vector<8x128xf32>
    %111 = arith.mulf %109, %110 : vector<8x128xf32>
    %112 = math.tanh %111 : vector<8x128xf32>
    %113 = vector.broadcast %8 : vector<1x128xf32> to vector<8x128xf32>
    %114 = arith.mulf %112, %113 : vector<8x128xf32>
    %115 = vector.broadcast %9 : vector<1x128xf32> to vector<8x128xf32>
    %116 = arith.addf %114, %115 : vector<8x128xf32>
    %117 = vector.extract_strided_slice %116 {offsets = [0, 32], sizes = [8, 32], strides = [1, 1]} : vector<8x128xf32> to vector<8x32xf32>
    %118 = arith.mulf %117, %103 : vector<8x32xf32>
    %119 = vector.extract_strided_slice %116 {offsets = [0, 0], sizes = [8, 32], strides = [1, 1]} : vector<8x128xf32> to vector<8x32xf32>
    %120 = vector.extract_strided_slice %116 {offsets = [0, 96], sizes = [8, 32], strides = [1, 1]} : vector<8x128xf32> to vector<8x32xf32>
    %121 = arith.mulf %119, %120 : vector<8x32xf32>
    %122 = arith.addf %118, %121 : vector<8x32xf32>
    %123 = vector.extract_strided_slice %116 {offsets = [0, 64], sizes = [8, 32], strides = [1, 1]} : vector<8x128xf32> to vector<8x32xf32>
    %124 = math.tanh %122 : vector<8x32xf32>
    %125 = arith.mulf %123, %124 : vector<8x32xf32>
    %c48 = arith.constant 48 : index
    %c0_27 = arith.constant 0 : index
    %126 = vector.load %arg13[%c48, %c0_27] : memref<64x128xf32, #tpu.memory_space<vmem>>, vector<8x128xf32>
    %cst_28 = arith.constant dense<0.000000e+00> : vector<8x128xf32>
    %127 = tpu.matmul %125, %7, %cst_28 {dimension_numbers = #tpu.dot_dimension_numbers<[1], [0], [0], [1], [0, 0, 1, 1], [], []>} : vector<8x32xf32>, vector<32x128xf32>, vector<8x128xf32> -> vector<8x128xf32>
    %128 = arith.addf %126, %127 : vector<8x128xf32>
    %129 = vector.broadcast %8 : vector<1x128xf32> to vector<8x128xf32>
    %130 = arith.mulf %128, %129 : vector<8x128xf32>
    %131 = math.tanh %130 : vector<8x128xf32>
    %132 = vector.broadcast %8 : vector<1x128xf32> to vector<8x128xf32>
    %133 = arith.mulf %131, %132 : vector<8x128xf32>
    %134 = vector.broadcast %9 : vector<1x128xf32> to vector<8x128xf32>
    %135 = arith.addf %133, %134 : vector<8x128xf32>
    %136 = vector.extract_strided_slice %135 {offsets = [0, 32], sizes = [8, 32], strides = [1, 1]} : vector<8x128xf32> to vector<8x32xf32>
    %137 = arith.mulf %136, %122 : vector<8x32xf32>
    %138 = vector.extract_strided_slice %135 {offsets = [0, 0], sizes = [8, 32], strides = [1, 1]} : vector<8x128xf32> to vector<8x32xf32>
    %139 = vector.extract_strided_slice %135 {offsets = [0, 96], sizes = [8, 32], strides = [1, 1]} : vector<8x128xf32> to vector<8x32xf32>
    %140 = arith.mulf %138, %139 : vector<8x32xf32>
    %141 = arith.addf %137, %140 : vector<8x32xf32>
    %142 = vector.extract_strided_slice %135 {offsets = [0, 64], sizes = [8, 32], strides = [1, 1]} : vector<8x128xf32> to vector<8x32xf32>
    %143 = math.tanh %141 : vector<8x32xf32>
    %144 = arith.mulf %142, %143 : vector<8x32xf32>
    %c56 = arith.constant 56 : index
    %c0_29 = arith.constant 0 : index
    %145 = vector.load %arg13[%c56, %c0_29] : memref<64x128xf32, #tpu.memory_space<vmem>>, vector<8x128xf32>
    %cst_30 = arith.constant dense<0.000000e+00> : vector<8x128xf32>
    %146 = tpu.matmul %144, %7, %cst_30 {dimension_numbers = #tpu.dot_dimension_numbers<[1], [0], [0], [1], [0, 0, 1, 1], [], []>} : vector<8x32xf32>, vector<32x128xf32>, vector<8x128xf32> -> vector<8x128xf32>
    %147 = arith.addf %145, %146 : vector<8x128xf32>
    %148 = vector.broadcast %8 : vector<1x128xf32> to vector<8x128xf32>
    %149 = arith.mulf %147, %148 : vector<8x128xf32>
    %150 = math.tanh %149 : vector<8x128xf32>
    %151 = vector.broadcast %8 : vector<1x128xf32> to vector<8x128xf32>
    %152 = arith.mulf %150, %151 : vector<8x128xf32>
    %153 = vector.broadcast %9 : vector<1x128xf32> to vector<8x128xf32>
    %154 = arith.addf %152, %153 : vector<8x128xf32>
    %155 = vector.extract_strided_slice %154 {offsets = [0, 32], sizes = [8, 32], strides = [1, 1]} : vector<8x128xf32> to vector<8x32xf32>
    %156 = arith.mulf %155, %141 : vector<8x32xf32>
    %157 = vector.extract_strided_slice %154 {offsets = [0, 0], sizes = [8, 32], strides = [1, 1]} : vector<8x128xf32> to vector<8x32xf32>
    %158 = vector.extract_strided_slice %154 {offsets = [0, 96], sizes = [8, 32], strides = [1, 1]} : vector<8x128xf32> to vector<8x32xf32>
    %159 = arith.mulf %157, %158 : vector<8x32xf32>
    %160 = arith.addf %156, %159 : vector<8x32xf32>
    %161 = vector.extract_strided_slice %154 {offsets = [0, 64], sizes = [8, 32], strides = [1, 1]} : vector<8x128xf32> to vector<8x32xf32>
    %162 = math.tanh %160 : vector<8x32xf32>
    %163 = arith.mulf %161, %162 : vector<8x32xf32>
    %cst_31 = arith.constant dense<0.000000e+00> : vector<8xf32>
    %164 = vector.multi_reduction <add>, %163, %cst_31 [1] : vector<8x32xf32> to vector<8xf32>
    %165 = vector.shape_cast %164 : vector<8xf32> to vector<8x1xf32>
    %166 = arith.mulf %163, %163 : vector<8x32xf32>
    %cst_32 = arith.constant dense<0.000000e+00> : vector<8xf32>
    %167 = vector.multi_reduction <add>, %166, %cst_32 [1] : vector<8x32xf32> to vector<8xf32>
    %168 = vector.shape_cast %167 : vector<8xf32> to vector<8x1xf32>
    %cst_33 = arith.constant 3.125000e-02 : f32
    %169 = vector.broadcast %cst_33 : f32 to vector<8x1xf32>
    %170 = arith.mulf %165, %169 : vector<8x1xf32>
    %cst_34 = arith.constant 3.125000e-02 : f32
    %171 = vector.broadcast %cst_34 : f32 to vector<8x1xf32>
    %172 = arith.mulf %168, %171 : vector<8x1xf32>
    %173 = arith.mulf %170, %170 : vector<8x1xf32>
    %174 = arith.subf %172, %173 : vector<8x1xf32>
    %175 = vector.broadcast %170 : vector<8x1xf32> to vector<8x32xf32>
    %176 = arith.subf %163, %175 : vector<8x32xf32>
    %cst_35 = arith.constant 9.99999974E-6 : f32
    %177 = vector.broadcast %cst_35 : f32 to vector<8x1xf32>
    %178 = arith.addf %174, %177 : vector<8x1xf32>
    %179 = math.rsqrt %178 : vector<8x1xf32>
    %180 = vector.broadcast %179 : vector<8x1xf32> to vector<8x32xf32>
    %181 = arith.mulf %176, %180 : vector<8x32xf32>
    %c0_36 = arith.constant 0 : index
    %c0_37 = arith.constant 0 : index
    %182 = vector.load %arg5[%c0_36, %c0_37] : memref<1x32xf32, #tpu.memory_space<vmem>>, vector<1x32xf32>
    %183 = vector.broadcast %182 : vector<1x32xf32> to vector<8x32xf32>
    %184 = arith.mulf %181, %183 : vector<8x32xf32>
    %c0_38 = arith.constant 0 : index
    %c0_39 = arith.constant 0 : index
    %185 = vector.load %arg6[%c0_38, %c0_39] : memref<1x32xf32, #tpu.memory_space<vmem>>, vector<1x32xf32>
    %186 = vector.broadcast %185 : vector<1x32xf32> to vector<8x32xf32>
    %187 = arith.addf %184, %186 : vector<8x32xf32>
    %c0_40 = arith.constant 0 : index
    %c0_41 = arith.constant 0 : index
    %188 = vector.load %arg9[%c0_40, %c0_41] : memref<2x8xf32, #tpu.memory_space<vmem>>, vector<2x8xf32>
    %cst_42 = arith.constant dense<0.000000e+00> : vector<2x32xf32>
    %189 = tpu.matmul %188, %187, %cst_42 {dimension_numbers = #tpu.dot_dimension_numbers<[1], [0], [0], [1], [0, 0, 1, 1], [], []>} : vector<2x8xf32>, vector<8x32xf32>, vector<2x32xf32> -> vector<2x32xf32>
    %c0_43 = arith.constant 0 : index
    %c0_44 = arith.constant 0 : index
    %190 = vector.load %arg7[%c0_43, %c0_44] : memref<32x32xf32, #tpu.memory_space<vmem>>, vector<32x32xf32>
    %cst_45 = arith.constant dense<0.000000e+00> : vector<2x32xf32>
    %191 = tpu.matmul %189, %190, %cst_45 {dimension_numbers = #tpu.dot_dimension_numbers<[1], [0], [0], [1], [0, 0, 1, 1], [], []>} : vector<2x32xf32>, vector<32x32xf32>, vector<2x32xf32> -> vector<2x32xf32>
    %c0_46 = arith.constant 0 : index
    %c0_47 = arith.constant 0 : index
    %192 = vector.load %arg8[%c0_46, %c0_47] : memref<1x32xf32, #tpu.memory_space<vmem>>, vector<1x32xf32>
    %193 = vector.broadcast %192 : vector<1x32xf32> to vector<2x32xf32>
    %194 = arith.addf %191, %193 : vector<2x32xf32>
    %195 = vector.extract_strided_slice %194 {offsets = [0, 0], sizes = [2, 16], strides = [1, 1]} : vector<2x32xf32> to vector<2x16xf32>
    %196 = vector.extract_strided_slice %194 {offsets = [0, 16], sizes = [2, 16], strides = [1, 1]} : vector<2x32xf32> to vector<2x16xf32>
    %c0_48 = arith.constant 0 : index
    %c0_49 = arith.constant 0 : index
    %197 = vector.load %arg10[%c0_48, %c0_49] : memref<2x16xf32, #tpu.memory_space<vmem>>, vector<2x16xf32>
    %cst_50 = arith.constant 5.000000e-01 : f32
    %198 = vector.broadcast %cst_50 : f32 to vector<2x16xf32>
    %199 = arith.mulf %198, %196 : vector<2x16xf32>
    %200 = math.exp %199 : vector<2x16xf32>
    %201 = arith.mulf %197, %200 : vector<2x16xf32>
    %202 = arith.addf %195, %201 : vector<2x16xf32>
    %c0_51 = arith.constant 0 : index
    %c0_52 = arith.constant 0 : index
    %203 = vector.load %arg11[%c0_51, %c0_52] : memref<2x16xf32, #tpu.memory_space<vmem>>, vector<2x16xf32>
    tpu.vector_store %arg11[%c0_51, %c0_52], %202 {strides = array<i32>} : memref<2x16xf32, #tpu.memory_space<vmem>>, vector<2x16xf32>,
    %c0_53 = arith.constant 0 : index
    %c0_54 = arith.constant 0 : index
    %204 = vector.load %arg12[%c0_53, %c0_54] : memref<2x32xf32, #tpu.memory_space<vmem>>, vector<2x32xf32>
    tpu.vector_store %arg12[%c0_53, %c0_54], %194 {strides = array<i32>} : memref<2x32xf32, #tpu.memory_space<vmem>>, vector<2x32xf32>,
    return
  }
}

</mosaic_0001>

<llo_original>
// kernel: character_net_forward.1
$region0: #{character_net_forward.1}
  #allocation0 [shape = 'u32[]', space=smem, size = 0x4, offset = 0x4, fixed_abs, tag = 'smem constant byte address 0x4 - core index']
  #allocation1 [shape = 'u32[144,128]{1,0:T(1,128)}', space=vmem, size = 0x12000, scoped, tag = 'internal scratch']
  #allocation2 [shape = 'f32[64,128]{1,0:T(8,128)}', space=vmem, size = 0x8000, scoped, tag = 'scratch operand']
  %s0 = inlined_call_operand.vmem [shape: f32[64,16], index: 0, kind: input, shape index: {}]
  %s1 = inlined_call_operand.vmem [shape: f32[16,128], index: 1, kind: input, shape index: {}]
  %s2 = inlined_call_operand.vmem [shape: f32[32,128], index: 2, kind: input, shape index: {}]
  %s3 = inlined_call_operand.vmem [shape: f32[1,128], index: 3, kind: input, shape index: {}]
  %s4 = inlined_call_operand.vmem [shape: f32[2,128], index: 4, kind: input, shape index: {}]
  %s5 = inlined_call_operand.vmem [shape: f32[1,32], index: 5, kind: input, shape index: {}]
  %s6 = inlined_call_operand.vmem [shape: f32[1,32], index: 6, kind: input, shape index: {}]
  %s7 = inlined_call_operand.vmem [shape: f32[32,32], index: 7, kind: input, shape index: {}]
  %s8 = inlined_call_operand.vmem [shape: f32[1,32], index: 8, kind: input, shape index: {}]
  %s9 = inlined_call_operand.vmem [shape: f32[2,8], index: 9, kind: input, shape index: {}]
  %s10 = inlined_call_operand.vmem [shape: f32[2,16], index: 10, kind: input, shape index: {}]
  %s11 = inlined_call_operand.hbm [shape: f32[2,16], index: 11, kind: output, shape index: {0}]
  %s12 = inlined_call_operand.vmem [shape: f32[2,32], index: 12, kind: output, shape index: {1}]
  %13 = xla_tuple %s11, %s12
  %s14 = sld [smem:[#allocation0]]
  $region62: #{character_net_forward.1} parent=0
    _
  %s16 = ssub.s32 1, %s14
  %s17 = scalar_select 0, %s16, %s14
  $region1: #{character_net_forward.1} parent=0
    #allocation3 [shape = 'u8[1024]{0}', space=vmem, size = 0x400, scoped, tag = 'output window, operand 0, single buffered']
    #allocation4 [shape = 's32[1]{0}', space=sflag, size = 0x4, scoped, tag = 'scoped memory for character_net_forward.1']
    %18 = vsyncpa [#allocation4], 0
    // Predicated region
    $region2: #{character_net_forward.1} parent=1 // pred_check
      _
    $region3: #{character_net_forward.1} parent=1 // pred_check_branch
      %20 = sbr.rel (0) target = $region5
    $region4: #{character_net_forward.1} parent=1 // pred_region
      _
    $region5: #{character_net_forward.1} parent=1 // pred_fallthru
      _
    // Predicated region
    $region6: #{character_net_forward.1} parent=1 // pred_check
      _
    $region7: #{character_net_forward.1} parent=1 // pred_check_branch
      %22 = sbr.rel (0) target = $region9
    $region8: #{character_net_forward.1} parent=1 // pred_region
      _
    $region9: #{character_net_forward.1} parent=1 // pred_fallthru
      _
    // Predicated region
    $region10: #{character_net_forward.1} parent=1 // pred_check
      _
    $region11: #{character_net_forward.1} parent=1 // pred_check_branch
      %24 = sbr.rel (0) target = $region13
    $region12: #{character_net_forward.1} parent=1 // pred_region
      _
    $region13: #{character_net_forward.1} parent=1 // pred_fallthru
      _
    // Predicated region
    $region14: #{character_net_forward.1} parent=1 // pred_check
      _
    $region15: #{character_net_forward.1} parent=1 // pred_check_branch
      %26 = sbr.rel (0) target = $region17
    $region16: #{character_net_forward.1} parent=1 // pred_region
      _
    $region17: #{character_net_forward.1} parent=1 // pred_fallthru
      _
    // Predicated region
    $region18: #{character_net_forward.1} parent=1 // pred_check
      _
    $region19: #{character_net_forward.1} parent=1 // pred_check_branch
      %28 = sbr.rel (0) target = $region21
    $region20: #{character_net_forward.1} parent=1 // pred_region
      _
    $region21: #{character_net_forward.1} parent=1 // pred_fallthru
      _
    // Predicated region
    $region22: #{character_net_forward.1} parent=1 // pred_check
      _
    $region23: #{character_net_forward.1} parent=1 // pred_check_branch
      %30 = sbr.rel (0) target = $region25
    $region24: #{character_net_forward.1} parent=1 // pred_region
      _
    $region25: #{character_net_forward.1} parent=1 // pred_fallthru
      _
    // Predicated region
    $region26: #{character_net_forward.1} parent=1 // pred_check
      _
    $region27: #{character_net_forward.1} parent=1 // pred_check_branch
      %32 = sbr.rel (0) target = $region29
    $region28: #{character_net_forward.1} parent=1 // pred_region
      _
    $region29: #{character_net_forward.1} parent=1 // pred_fallthru
      _
    // Predicated region
    $region30: #{character_net_forward.1} parent=1 // pred_check
      _
    $region31: #{character_net_forward.1} parent=1 // pred_check_branch
      %34 = sbr.rel (0) target = $region33
    $region32: #{character_net_forward.1} parent=1 // pred_region
      _
    $region33: #{character_net_forward.1} parent=1 // pred_fallthru
      _
    // Predicated region
    $region34: #{character_net_forward.1} parent=1 // pred_check
      _
    $region35: #{character_net_forward.1} parent=1 // pred_check_branch
      %36 = sbr.rel (0) target = $region37
    $region36: #{character_net_forward.1} parent=1 // pred_region
      _
    $region37: #{character_net_forward.1} parent=1 // pred_fallthru
      _
    // Predicated region
    $region38: #{character_net_forward.1} parent=1 // pred_check
      _
    $region39: #{character_net_forward.1} parent=1 // pred_check_branch
      %38 = sbr.rel (0) target = $region41
    $region40: #{character_net_forward.1} parent=1 // pred_region
      _
    $region41: #{character_net_forward.1} parent=1 // pred_fallthru
      _
    // Predicated region
    $region42: #{character_net_forward.1} parent=1 // pred_check
      _
    $region43: #{character_net_forward.1} parent=1 // pred_check_branch
      %40 = sbr.rel (0) target = $region45
    $region44: #{character_net_forward.1} parent=1 // pred_region
      _
    $region45: #{character_net_forward.1} parent=1 // pred_fallthru
      _
    %v41 = vld [vmem:[%s0] sm:$0xff]
    %v42 = vld [vmem:[%s0 + $0x8] sm:$0xff]
    %v43 = vld [vmem:[%s0 + $0x10] sm:$0xff]
    %v44 = vld [vmem:[%s0 + $0x18] sm:$0xff]
    %v45 = vld [vmem:[%s0 + $0x20] sm:$0xff]
    %v46 = vld [vmem:[%s0 + $0x28] sm:$0xff]
    %v47 = vld [vmem:[%s0 + $0x30] sm:$0xff]
    %v48 = vld [vmem:[%s0 + $0x38] sm:$0xff]
    %v49 = vld [vmem:[%s1] sm:$0xff]
    %v50 = vld [vmem:[%s1 + $0x8] sm:$0xff]
    %v51 = vld [vmem:[%s3] sm:$0x1]
    %v53 = vlaneseq
    %v54 = vshrl.u32 %v53, 7
    %v55 = vsub.s32 0, %v54
    %v56 = vrot.slane %v51, %v55
    %vm58 = vcmask 130048
    %v60 = vsel %vm58, %v41, 0
    %v63 = vsel %vm58, %v42, 0
    %v66 = vsel %vm58, %v43, 0
    %v69 = vsel %vm58, %v44, 0
    %v72 = vsel %vm58, %v45, 0
    %v75 = vsel %vm58, %v46, 0
    %v78 = vsel %vm58, %v47, 0
    %v81 = vsel %vm58, %v48, 0
    %83 = vmatprep.subr.mxu0 0.0
    %84 = vmatpush1.msra.mxu0 0.0
    %85 = vmatprep.subr.mxu0 0.0
    %86 = vmatpush1.msra.mxu0 0.0
    %87 = vmatprep.subr.mxu0 0.0
    %88 = vmatpush1.msra.mxu0 0.0
    %89 = vmatprep.subr.mxu0 0.0
    %90 = vmatpush1.msra.mxu0 0.0
    %91 = vmatprep.subr.mxu0 0.0
    %92 = vmatpush1.msra.mxu0 0.0
    %93 = vmatprep.subr.mxu0 0.0
    %94 = vmatpush1.msra.mxu0 0.0
    %95 = vmatprep.subr.mxu0 0.0
    %96 = vmatpush1.msra.mxu0 0.0
    %97 = vmatprep.subr.mxu0 0.0
    %98 = vmatpush1.msra.mxu0 0.0
    %99 = vmatprep.subr.mxu0 0.0
    %100 = vmatpush1.msra.mxu0 0.0
    %101 = vmatprep.subr.mxu0 0.0
    %102 = vmatpush1.msra.mxu0 0.0
    %103 = vmatprep.subr.mxu0 0.0
    %104 = vmatpush1.msra.mxu0 0.0
    %105 = vmatprep.subr.mxu0 0.0
    %106 = vmatpush1.msra.mxu0 0.0
    %107 = vmatprep.subr.mxu0 0.0
    %108 = vmatpush1.msra.mxu0 0.0
    %109 = vmatprep.subr.mxu0 0.0
    %110 = vmatpush1.msra.mxu0 0.0
    %111 = vmatprep.subr.mxu0 0.0
    %112 = vmatpush1.msra.mxu0 %v50
    %113 = vmatprep.subr.mxu0 0.0
    %114 = vmatpush1.msra.mxu0 %v49
    %115 = vmatprep.subr.mxu0 0.0
    %116 = vmatpush2.msra.mxu0 0.0
    %117 = vmatprep.subr.mxu0 0.0
    %118 = vmatpush2.msra.mxu0 0.0
    %119 = vmatprep.subr.mxu0 0.0
    %120 = vmatpush2.msra.mxu0 0.0
    %121 = vmatprep.subr.mxu0 0.0
    %122 = vmatpush2.msra.mxu0 0.0
    %123 = vmatprep.subr.mxu0 0.0
    %124 = vmatpush2.msra.mxu0 0.0
    %125 = vmatprep.subr.mxu0 0.0
    %126 = vmatpush2.msra.mxu0 0.0
    %127 = vmatprep.subr.mxu0 0.0
    %128 = vmatpush2.msra.mxu0 0.0
    %129 = vmatprep.subr.mxu0 0.0
    %130 = vmatpush2.msra.mxu0 0.0
    %131 = vmatprep.subr.mxu0 0.0
    %132 = vmatpush2.msra.mxu0 0.0
    %133 = vmatprep.subr.mxu0 0.0
    %134 = vmatpush2.msra.mxu0 0.0
    %135 = vmatprep.subr.mxu0 0.0
    %136 = vmatpush2.msra.mxu0 0.0
    %137 = vmatprep.subr.mxu0 0.0
    %138 = vmatpush2.msra.mxu0 0.0
    %139 = vmatprep.subr.mxu0 0.0
    %140 = vmatpush2.msra.mxu0 0.0
    %141 = vmatprep.subr.mxu0 0.0
    %142 = vmatpush2.msra.mxu0 0.0
    %143 = vmatprep.subr.mxu0 0.0
    %144 = vmatpush2.msra.mxu0 0.0
    %145 = vmatprep.subr.mxu0 0.0
    %146 = vmatpush2.msra.mxu0 0.0
    %147 = vmatprep.mubr.f32.mxu0 0.0
    %148 = vmatmul.mubr.f32.gmra.mxu0 %v60
    %v149 = vpop.f32.mrf.mxu0
    %v150 = vadd.f32 %v56, %v149
    %v151 = vpop.f32.mrf.mxu0
    %152 = vmatprep.mubr.f32.mxu0 0.0
    %153 = vmatmul.mubr.f32.gmra.mxu0 %v63
    %v154 = vpop.f32.mrf.mxu0
    %v155 = vadd.f32 %v56, %v154
    %v156 = vpop.f32.mrf.mxu0
    %157 = vmatprep.mubr.f32.mxu0 0.0
    %158 = vmatmul.mubr.f32.gmra.mxu0 %v66
    %v159 = vpop.f32.mrf.mxu0
    %v160 = vadd.f32 %v56, %v159
    %v161 = vpop.f32.mrf.mxu0
    %162 = vmatprep.mubr.f32.mxu0 0.0
    %163 = vmatmul.mubr.f32.gmra.mxu0 %v69
    %v164 = vpop.f32.mrf.mxu0
    %v165 = vadd.f32 %v56, %v164
    %v166 = vpop.f32.mrf.mxu0
    %167 = vmatprep.mubr.f32.mxu0 0.0
    %168 = vmatmul.mubr.f32.gmra.mxu0 %v72
    %v169 = vpop.f32.mrf.mxu0
    %v170 = vadd.f32 %v56, %v169
    %v171 = vpop.f32.mrf.mxu0
    %172 = vmatprep.mubr.f32.mxu0 0.0
    %173 = vmatmul.mubr.f32.gmra.mxu0 %v75
    %v174 = vpop.f32.mrf.mxu0
    %v175 = vadd.f32 %v56, %v174
    %v176 = vpop.f32.mrf.mxu0
    %177 = vmatprep.mubr.f32.mxu0 0.0
    %178 = vmatmul.mubr.f32.gmra.mxu0 %v78
    %v179 = vpop.f32.mrf.mxu0
    %v180 = vadd.f32 %v56, %v179
    %v181 = vpop.f32.mrf.mxu0
    %182 = vmatprep.mubr.f32.mxu0 0.0
    %183 = vmatmul.mubr.f32.gmra.mxu0 %v81
    %v184 = vpop.f32.mrf.mxu0
    %v185 = vadd.f32 %v56, %v184
    %v186 = vpop.f32.mrf.mxu0
    %187 = vdwg.mxu0
    %188 = vst [vmem:[#allocation2] sm:$0xff] %v150
    %189 = vst [vmem:[#allocation2 + $0x8] sm:$0xff] %v155
    %190 = vst [vmem:[#allocation2 + $0x10] sm:$0xff] %v160
    %191 = vst [vmem:[#allocation2 + $0x18] sm:$0xff] %v165
    %192 = vst [vmem:[#allocation2 + $0x20] sm:$0xff] %v170
    %193 = vst [vmem:[#allocation2 + $0x28] sm:$0xff] %v175
    %194 = vst [vmem:[#allocation2 + $0x30] sm:$0xff] %v180
    %195 = vst [vmem:[#allocation2 + $0x38] sm:$0xff] %v185
    %v196 = vld [vmem:[%s2] sm:$0xff]
    %v197 = vld [vmem:[%s2 + $0x8] sm:$0xff]
    %v198 = vld [vmem:[%s2 + $0x10] sm:$0xff]
    %v199 = vld [vmem:[%s2 + $0x18] sm:$0xff]
    %v200 = vld [vmem:[%s4] sm:$0x1]
    %v201 = vld [vmem:[%s4 + $0x1] sm:$0x1]
    %v202 = vld [vmem:[#allocation2] sm:$0xff]
    %vm203 = vcmask 261120
    %v205 = vsel %vm203, 0.0, 0
    %207 = vmatprep.subr.mxu0 0.0
    %208 = vmatpush1.msra.mxu0 0.0
    %209 = vmatprep.subr.mxu0 0.0
    %210 = vmatpush1.msra.mxu0 0.0
    %211 = vmatprep.subr.mxu0 0.0
    %212 = vmatpush1.msra.mxu0 0.0
    %213 = vmatprep.subr.mxu0 0.0
    %214 = vmatpush1.msra.mxu0 0.0
    %215 = vmatprep.subr.mxu0 0.0
    %216 = vmatpush1.msra.mxu0 0.0
    %217 = vmatprep.subr.mxu0 0.0
    %218 = vmatpush1.msra.mxu0 0.0
    %219 = vmatprep.subr.mxu0 0.0
    %220 = vmatpush1.msra.mxu0 0.0
    %221 = vmatprep.subr.mxu0 0.0
    %222 = vmatpush1.msra.mxu0 0.0
    %223 = vmatprep.subr.mxu0 0.0
    %224 = vmatpush1.msra.mxu0 0.0
    %225 = vmatprep.subr.mxu0 0.0
    %226 = vmatpush1.msra.mxu0 0.0
    %227 = vmatprep.subr.mxu0 0.0
    %228 = vmatpush1.msra.mxu0 0.0
    %229 = vmatprep.subr.mxu0 0.0
    %230 = vmatpush1.msra.mxu0 0.0
    %231 = vmatprep.subr.mxu0 0.0
    %232 = vmatpush1.msra.mxu0 %v199
    %233 = vmatprep.subr.mxu0 0.0
    %234 = vmatpush1.msra.mxu0 %v198
    %235 = vmatprep.subr.mxu0 0.0
    %236 = vmatpush1.msra.mxu0 %v197
    %237 = vmatprep.subr.mxu0 0.0
    %238 = vmatpush1.msra.mxu0 %v196
    %239 = vmatprep.subr.mxu0 0.0
    %240 = vmatpush2.msra.mxu0 0.0
    %241 = vmatprep.subr.mxu0 0.0
    %242 = vmatpush2.msra.mxu0 0.0
    %243 = vmatprep.subr.mxu0 0.0
    %244 = vmatpush2.msra.mxu0 0.0
    %245 = vmatprep.subr.mxu0 0.0
    %246 = vmatpush2.msra.mxu0 0.0
    %247 = vmatprep.subr.mxu0 0.0
    %248 = vmatpush2.msra.mxu0 0.0
    %249 = vmatprep.subr.mxu0 0.0
    %250 = vmatpush2.msra.mxu0 0.0
    %251 = vmatprep.subr.mxu0 0.0
    %252 = vmatpush2.msra.mxu0 0.0
    %253 = vmatprep.subr.mxu0 0.0
    %254 = vmatpush2.msra.mxu0 0.0
    %255 = vmatprep.subr.mxu0 0.0
    %256 = vmatpush2.msra.mxu0 0.0
    %257 = vmatprep.subr.mxu0 0.0
    %258 = vmatpush2.msra.mxu0 0.0
    %259 = vmatprep.subr.mxu0 0.0
    %260 = vmatpush2.msra.mxu0 0.0
    %261 = vmatprep.subr.mxu0 0.0
    %262 = vmatpush2.msra.mxu0 0.0
    %263 = vmatprep.subr.mxu0 0.0
    %264 = vmatpush2.msra.mxu0 0.0
    %265 = vmatprep.subr.mxu0 0.0
    %266 = vmatpush2.msra.mxu0 0.0
    %267 = vmatprep.subr.mxu0 0.0
    %268 = vmatpush2.msra.mxu0 0.0
    %269 = vmatprep.subr.mxu0 0.0
    %270 = vmatpush2.msra.mxu0 0.0
    %271 = vmatprep.mubr.f32.mxu0 0.0
    %272 = vmatmul.mubr.f32.gmra.mxu0 %v205
    %v273 = vpop.f32.mrf.mxu0
    %v274 = vadd.f32 0.0, %v273
    %v275 = vpop.f32.mrf.mxu0
    %276 = vdwg.mxu0
    %v277 = vadd.f32 %v202, %v274
    %v278 = vlaneseq
    %v279 = vshrl.u32 %v278, 7
    %v280 = vsub.s32 0, %v279
    %v281 = vrot.slane %v200, %v280
    %v282 = vmul.f32 %v277, %v281
    %v283 = vtanh.pop %v282
    %v284 = vmul.f32 %v283, %v281
    %v285 = vlaneseq
    %v286 = vshrl.u32 %v285, 7
    %v287 = vsub.s32 0, %v286
    %v288 = vrot.slane %v201, %v287
    %v289 = vadd.f32 %v284, %v288
    %v290 = vmul.f32 %v289, 0.0
    %292 = vrot.lane.b32.xlu0 %v289, 32
    %v293 = vpop.permute.xlu0 %292
    %v295 = vmul.f32 %v289, %v293
    %297 = vrot.lane.b32.xlu0 %v295, 32
    %v298 = vpop.permute.xlu0 %297
    %v300 = vadd.f32 %v290, %v298
    %v301 = vtanh.pop %v300
    %303 = vrot.lane.b32.xlu0 %v301, 32
    %v304 = vpop.permute.xlu0 %303
    %v306 = vmul.f32 %v289, %v304
    %v307 = vld [vmem:[#allocation2 + $0x8] sm:$0xff]
    %309 = vrot.lane.b32.xlu0 %v306, 64
    %v310 = vpop.permute.xlu0 %309
    %v311 = vsel %vm203, %v310, 0
    %313 = vmatprep.subr.mxu0 0.0
    %314 = vmatpush1.msra.mxu0 0.0
    %315 = vmatprep.subr.mxu0 0.0
    %316 = vmatpush1.msra.mxu0 0.0
    %317 = vmatprep.subr.mxu0 0.0
    %318 = vmatpush1.msra.mxu0 0.0
    %319 = vmatprep.subr.mxu0 0.0
    %320 = vmatpush1.msra.mxu0 0.0
    %321 = vmatprep.subr.mxu0 0.0
    %322 = vmatpush1.msra.mxu0 0.0
    %323 = vmatprep.subr.mxu0 0.0
    %324 = vmatpush1.msra.mxu0 0.0
    %325 = vmatprep.subr.mxu0 0.0
    %326 = vmatpush1.msra.mxu0 0.0
    %327 = vmatprep.subr.mxu0 0.0
    %328 = vmatpush1.msra.mxu0 0.0
    %329 = vmatprep.subr.mxu0 0.0
    %330 = vmatpush1.msra.mxu0 0.0
    %331 = vmatprep.subr.mxu0 0.0
    %332 = vmatpush1.msra.mxu0 0.0
    %333 = vmatprep.subr.mxu0 0.0
    %334 = vmatpush1.msra.mxu0 0.0
    %335 = vmatprep.subr.mxu0 0.0
    %336 = vmatpush1.msra.mxu0 0.0
    %337 = vmatprep.subr.mxu0 0.0
    %338 = vmatpush1.msra.mxu0 %v199
    %339 = vmatprep.subr.mxu0 0.0
    %340 = vmatpush1.msra.mxu0 %v198
    %341 = vmatprep.subr.mxu0 0.0
    %342 = vmatpush1.msra.mxu0 %v197
    %343 = vmatprep.subr.mxu0 0.0
    %344 = vmatpush1.msra.mxu0 %v196
    %345 = vmatprep.subr.mxu0 0.0
    %346 = vmatpush2.msra.mxu0 0.0
    %347 = vmatprep.subr.mxu0 0.0
    %348 = vmatpush2.msra.mxu0 0.0
    %349 = vmatprep.subr.mxu0 0.0
    %350 = vmatpush2.msra.mxu0 0.0
    %351 = vmatprep.subr.mxu0 0.0
    %352 = vmatpush2.msra.mxu0 0.0
    %353 = vmatprep.subr.mxu0 0.0
    %354 = vmatpush2.msra.mxu0 0.0
    %355 = vmatprep.subr.mxu0 0.0
    %356 = vmatpush2.msra.mxu0 0.0
    %357 = vmatprep.subr.mxu0 0.0
    %358 = vmatpush2.msra.mxu0 0.0
    %359 = vmatprep.subr.mxu0 0.0
    %360 = vmatpush2.msra.mxu0 0.0
    %361 = vmatprep.subr.mxu0 0.0
    %362 = vmatpush2.msra.mxu0 0.0
    %363 = vmatprep.subr.mxu0 0.0
    %364 = vmatpush2.msra.mxu0 0.0
    %365 = vmatprep.subr.mxu0 0.0
    %366 = vmatpush2.msra.mxu0 0.0
    %367 = vmatprep.subr.mxu0 0.0
    %368 = vmatpush2.msra.mxu0 0.0
    %369 = vmatprep.subr.mxu0 0.0
    %370 = vmatpush2.msra.mxu0 0.0
    %371 = vmatprep.subr.mxu0 0.0
    %372 = vmatpush2.msra.mxu0 0.0
    %373 = vmatprep.subr.mxu0 0.0
    %374 = vmatpush2.msra.mxu0 0.0
    %375 = vmatprep.subr.mxu0 0.0
    %376 = vmatpush2.msra.mxu0 0.0
    %377 = vmatprep.mubr.f32.mxu0 0.0
    %378 = vmatmul.mubr.f32.gmra.mxu0 %v311
    %v379 = vpop.f32.mrf.mxu0
    %v380 = vadd.f32 0.0, %v379
    %v381 = vpop.f32.mrf.mxu0
    %382 = vdwg.mxu0
    %v383 = vadd.f32 %v307, %v380
    %v384 = vmul.f32 %v383, %v281
    %v385 = vtanh.pop %v384
    %v386 = vmul.f32 %v385, %v281
    %v387 = vadd.f32 %v386, %v288
    %v388 = vmul.f32 %v387, %v300
    %390 = vrot.lane.b32.xlu0 %v387, 32
    %v391 = vpop.permute.xlu0 %390
    %v393 = vmul.f32 %v387, %v391
    %395 = vrot.lane.b32.xlu0 %v393, 32
    %v396 = vpop.permute.xlu0 %395
    %v398 = vadd.f32 %v388, %v396
    %v399 = vtanh.pop %v398
    %401 = vrot.lane.b32.xlu0 %v399, 32
    %v402 = vpop.permute.xlu0 %401
    %v404 = vmul.f32 %v387, %v402
    %v405 = vld [vmem:[#allocation2 + $0x10] sm:$0xff]
    %407 = vrot.lane.b32.xlu0 %v404, 64
    %v408 = vpop.permute.xlu0 %407
    %v409 = vsel %vm203, %v408, 0
    %411 = vmatprep.subr.mxu0 0.0
    %412 = vmatpush1.msra.mxu0 0.0
    %413 = vmatprep.subr.mxu0 0.0
    %414 = vmatpush1.msra.mxu0 0.0
    %415 = vmatprep.subr.mxu0 0.0
    %416 = vmatpush1.msra.mxu0 0.0
    %417 = vmatprep.subr.mxu0 0.0
    %418 = vmatpush1.msra.mxu0 0.0
    %419 = vmatprep.subr.mxu0 0.0
    %420 = vmatpush1.msra.mxu0 0.0
    %421 = vmatprep.subr.mxu0 0.0
    %422 = vmatpush1.msra.mxu0 0.0
    %423 = vmatprep.subr.mxu0 0.0
    %424 = vmatpush1.msra.mxu0 0.0
    %425 = vmatprep.subr.mxu0 0.0
    %426 = vmatpush1.msra.mxu0 0.0
    %427 = vmatprep.subr.mxu0 0.0
    %428 = vmatpush1.msra.mxu0 0.0
    %429 = vmatprep.subr.mxu0 0.0
    %430 = vmatpush1.msra.mxu0 0.0
    %431 = vmatprep.subr.mxu0 0.0
    %432 = vmatpush1.msra.mxu0 0.0
    %433 = vmatprep.subr.mxu0 0.0
    %434 = vmatpush1.msra.mxu0 0.0
    %435 = vmatprep.subr.mxu0 0.0
    %436 = vmatpush1.msra.mxu0 %v199
    %437 = vmatprep.subr.mxu0 0.0
    %438 = vmatpush1.msra.mxu0 %v198
    %439 = vmatprep.subr.mxu0 0.0
    %440 = vmatpush1.msra.mxu0 %v197
    %441 = vmatprep.subr.mxu0 0.0
    %442 = vmatpush1.msra.mxu0 %v196
    %443 = vmatprep.subr.mxu0 0.0
    %444 = vmatpush2.msra.mxu0 0.0
    %445 = vmatprep.subr.mxu0 0.0
    %446 = vmatpush2.msra.mxu0 0.0
    %447 = vmatprep.subr.mxu0 0.0
    %448 = vmatpush2.msra.mxu0 0.0
    %449 = vmatprep.subr.mxu0 0.0
    %450 = vmatpush2.msra.mxu0 0.0
    %451 = vmatprep.subr.mxu0 0.0
    %452 = vmatpush2.msra.mxu0 0.0
    %453 = vmatprep.subr.mxu0 0.0
    %454 = vmatpush2.msra.mxu0 0.0
    %455 = vmatprep.subr.mxu0 0.0
    %456 = vmatpush2.msra.mxu0 0.0
    %457 = vmatprep.subr.mxu0 0.0
    %458 = vmatpush2.msra.mxu0 0.0
    %459 = vmatprep.subr.mxu0 0.0
    %460 = vmatpush2.msra.mxu0 0.0
    %461 = vmatprep.subr.mxu0 0.0
    %462 = vmatpush2.msra.mxu0 0.0
    %463 = vmatprep.subr.mxu0 0.0
    %464 = vmatpush2.msra.mxu0 0.0
    %465 = vmatprep.subr.mxu0 0.0
    %466 = vmatpush2.msra.mxu0 0.0
    %467 = vmatprep.subr.mxu0 0.0
    %468 = vmatpush2.msra.mxu0 0.0
    %469 = vmatprep.subr.mxu0 0.0
    %470 = vmatpush2.msra.mxu0 0.0
    %471 = vmatprep.subr.mxu0 0.0
    %472 = vmatpush2.msra.mxu0 0.0
    %473 = vmatprep.subr.mxu0 0.0
    %474 = vmatpush2.msra.mxu0 0.0
    %475 = vmatprep.mubr.f32.mxu0 0.0
    %476 = vmatmul.mubr.f32.gmra.mxu0 %v409
    %v477 = vpop.f32.mrf.mxu0
    %v478 = vadd.f32 0.0, %v477
    %v479 = vpop.f32.mrf.mxu0
    %480 = vdwg.mxu0
    %v481 = vadd.f32 %v405, %v478
    %v482 = vmul.f32 %v481, %v281
    %v483 = vtanh.pop %v482
    %v484 = vmul.f32 %v483, %v281
    %v485 = vadd.f32 %v484, %v288
    %v486 = vmul.f32 %v485, %v398
    %488 = vrot.lane.b32.xlu0 %v485, 32
    %v489 = vpop.permute.xlu0 %488
    %v491 = vmul.f32 %v485, %v489
    %493 = vrot.lane.b32.xlu0 %v491, 32
    %v494 = vpop.permute.xlu0 %493
    %v496 = vadd.f32 %v486, %v494
    %v497 = vtanh.pop %v496
    %499 = vrot.lane.b32.xlu0 %v497, 32
    %v500 = vpop.permute.xlu0 %499
    %v502 = vmul.f32 %v485, %v500
    %v503 = vld [vmem:[#allocation2 + $0x18] sm:$0xff]
    %505 = vrot.lane.b32.xlu0 %v502, 64
    %v506 = vpop.permute.xlu0 %505
    %v507 = vsel %vm203, %v506, 0
    %509 = vmatprep.subr.mxu0 0.0
    %510 = vmatpush1.msra.mxu0 0.0
    %511 = vmatprep.subr.mxu0 0.0
    %512 = vmatpush1.msra.mxu0 0.0
    %513 = vmatprep.subr.mxu0 0.0
    %514 = vmatpush1.msra.mxu0 0.0
    %515 = vmatprep.subr.mxu0 0.0
    %516 = vmatpush1.msra.mxu0 0.0
    %517 = vmatprep.subr.mxu0 0.0
    %518 = vmatpush1.msra.mxu0 0.0
    %519 = vmatprep.subr.mxu0 0.0
    %520 = vmatpush1.msra.mxu0 0.0
    %521 = vmatprep.subr.mxu0 0.0
    %522 = vmatpush1.msra.mxu0 0.0
    %523 = vmatprep.subr.mxu0 0.0
    %524 = vmatpush1.msra.mxu0 0.0
    %525 = vmatprep.subr.mxu0 0.0
    %526 = vmatpush1.msra.mxu0 0.0
    %527 = vmatprep.subr.mxu0 0.0
    %528 = vmatpush1.msra.mxu0 0.0
    %529 = vmatprep.subr.mxu0 0.0
    %530 = vmatpush1.msra.mxu0 0.0
    %531 = vmatprep.subr.mxu0 0.0
    %532 = vmatpush1.msra.mxu0 0.0
    %533 = vmatprep.subr.mxu0 0.0
    %534 = vmatpush1.msra.mxu0 %v199
    %535 = vmatprep.subr.mxu0 0.0
    %536 = vmatpush1.msra.mxu0 %v198
    %537 = vmatprep.subr.mxu0 0.0
    %538 = vmatpush1.msra.mxu0 %v197
    %539 = vmatprep.subr.mxu0 0.0
    %540 = vmatpush1.msra.mxu0 %v196
    %541 = vmatprep.subr.mxu0 0.0
    %542 = vmatpush2.msra.mxu0 0.0
    %543 = vmatprep.subr.mxu0 0.0
    %544 = vmatpush2.msra.mxu0 0.0
    %545 = vmatprep.subr.mxu0 0.0
    %546 = vmatpush2.msra.mxu0 0.0
    %547 = vmatprep.subr.mxu0 0.0
    %548 = vmatpush2.msra.mxu0 0.0
    %549 = vmatprep.subr.mxu0 0.0
    %550 = vmatpush2.msra.mxu0 0.0
    %551 = vmatprep.subr.mxu0 0.0
    %552 = vmatpush2.msra.mxu0 0.0
    %553 = vmatprep.subr.mxu0 0.0
    %554 = vmatpush2.msra.mxu0 0.0
    %555 = vmatprep.subr.mxu0 0.0
    %556 = vmatpush2.msra.mxu0 0.0
    %557 = vmatprep.subr.mxu0 0.0
    %558 = vmatpush2.msra.mxu0 0.0
    %559 = vmatprep.subr.mxu0 0.0
    %560 = vmatpush2.msra.mxu0 0.0
    %561 = vmatprep.subr.mxu0 0.0
    %562 = vmatpush2.msra.mxu0 0.0
    %563 = vmatprep.subr.mxu0 0.0
    %564 = vmatpush2.msra.mxu0 0.0
    %565 = vmatprep.subr.mxu0 0.0
    %566 = vmatpush2.msra.mxu0 0.0
    %567 = vmatprep.subr.mxu0 0.0
    %568 = vmatpush2.msra.mxu0 0.0
    %569 = vmatprep.subr.mxu0 0.0
    %570 = vmatpush2.msra.mxu0 0.0
    %571 = vmatprep.subr.mxu0 0.0
    %572 = vmatpush2.msra.mxu0 0.0
    %573 = vmatprep.mubr.f32.mxu0 0.0
    %574 = vmatmul.mubr.f32.gmra.mxu0 %v507
    %v575 = vpop.f32.mrf.mxu0
    %v576 = vadd.f32 0.0, %v575
    %v577 = vpop.f32.mrf.mxu0
    %578 = vdwg.mxu0
    %v579 = vadd.f32 %v503, %v576
    %v580 = vmul.f32 %v579, %v281
    %v581 = vtanh.pop %v580
    %v582 = vmul.f32 %v581, %v281
    %v583 = vadd.f32 %v582, %v288
    %v584 = vmul.f32 %v583, %v496
    %586 = vrot.lane.b32.xlu0 %v583, 32
    %v587 = vpop.permute.xlu0 %586
    %v589 = vmul.f32 %v583, %v587
    %591 = vrot.lane.b32.xlu0 %v589, 32
    %v592 = vpop.permute.xlu0 %591
    %v594 = vadd.f32 %v584, %v592
    %v595 = vtanh.pop %v594
    %597 = vrot.lane.b32.xlu0 %v595, 32
    %v598 = vpop.permute.xlu0 %597
    %v600 = vmul.f32 %v583, %v598
    %v601 = vld [vmem:[#allocation2 + $0x20] sm:$0xff]
    %603 = vrot.lane.b32.xlu0 %v600, 64
    %v604 = vpop.permute.xlu0 %603
    %v605 = vsel %vm203, %v604, 0
    %607 = vmatprep.subr.mxu0 0.0
    %608 = vmatpush1.msra.mxu0 0.0
    %609 = vmatprep.subr.mxu0 0.0
    %610 = vmatpush1.msra.mxu0 0.0
    %611 = vmatprep.subr.mxu0 0.0
    %612 = vmatpush1.msra.mxu0 0.0
    %613 = vmatprep.subr.mxu0 0.0
    %614 = vmatpush1.msra.mxu0 0.0
    %615 = vmatprep.subr.mxu0 0.0
    %616 = vmatpush1.msra.mxu0 0.0
    %617 = vmatprep.subr.mxu0 0.0
    %618 = vmatpush1.msra.mxu0 0.0
    %619 = vmatprep.subr.mxu0 0.0
    %620 = vmatpush1.msra.mxu0 0.0
    %621 = vmatprep.subr.mxu0 0.0
    %622 = vmatpush1.msra.mxu0 0.0
    %623 = vmatprep.subr.mxu0 0.0
    %624 = vmatpush1.msra.mxu0 0.0
    %625 = vmatprep.subr.mxu0 0.0
    %626 = vmatpush1.msra.mxu0 0.0
    %627 = vmatprep.subr.mxu0 0.0
    %628 = vmatpush1.msra.mxu0 0.0
    %629 = vmatprep.subr.mxu0 0.0
    %630 = vmatpush1.msra.mxu0 0.0
    %631 = vmatprep.subr.mxu0 0.0
    %632 = vmatpush1.msra.mxu0 %v199
    %633 = vmatprep.subr.mxu0 0.0
    %634 = vmatpush1.msra.mxu0 %v198
    %635 = vmatprep.subr.mxu0 0.0
    %636 = vmatpush1.msra.mxu0 %v197
    %637 = vmatprep.subr.mxu0 0.0
    %638 = vmatpush1.msra.mxu0 %v196
    %639 = vmatprep.subr.mxu0 0.0
    %640 = vmatpush2.msra.mxu0 0.0
    %641 = vmatprep.subr.mxu0 0.0
    %642 = vmatpush2.msra.mxu0 0.0
    %643 = vmatprep.subr.mxu0 0.0
    %644 = vmatpush2.msra.mxu0 0.0
    %645 = vmatprep.subr.mxu0 0.0
    %646 = vmatpush2.msra.mxu0 0.0
    %647 = vmatprep.subr.mxu0 0.0
    %648 = vmatpush2.msra.mxu0 0.0
    %649 = vmatprep.subr.mxu0 0.0
    %650 = vmatpush2.msra.mxu0 0.0
    %651 = vmatprep.subr.mxu0 0.0
    %652 = vmatpush2.msra.mxu0 0.0
    %653 = vmatprep.subr.mxu0 0.0
    %654 = vmatpush2.msra.mxu0 0.0
    %655 = vmatprep.subr.mxu0 0.0
    %656 = vmatpush2.msra.mxu0 0.0
    %657 = vmatprep.subr.mxu0 0.0
    %658 = vmatpush2.msra.mxu0 0.0
    %659 = vmatprep.subr.mxu0 0.0
    %660 = vmatpush2.msra.mxu0 0.0
    %661 = vmatprep.subr.mxu0 0.0
    %662 = vmatpush2.msra.mxu0 0.0
    %663 = vmatprep.subr.mxu0 0.0
    %664 = vmatpush2.msra.mxu0 0.0
    %665 = vmatprep.subr.mxu0 0.0
    %666 = vmatpush2.msra.mxu0 0.0
    %667 = vmatprep.subr.mxu0 0.0
    %668 = vmatpush2.msra.mxu0 0.0
    %669 = vmatprep.subr.mxu0 0.0
    %670 = vmatpush2.msra.mxu0 0.0
    %671 = vmatprep.mubr.f32.mxu0 0.0
    %672 = vmatmul.mubr.f32.gmra.mxu0 %v605
    %v673 = vpop.f32.mrf.mxu0
    %v674 = vadd.f32 0.0, %v673
    %v675 = vpop.f32.mrf.mxu0
    %676 = vdwg.mxu0
    %v677 = vadd.f32 %v601, %v674
    %v678 = vmul.f32 %v677, %v281
    %v679 = vtanh.pop %v678
    %v680 = vmul.f32 %v679, %v281
    %v681 = vadd.f32 %v680, %v288
    %v682 = vmul.f32 %v681, %v594
    %684 = vrot.lane.b32.xlu0 %v681, 32
    %v685 = vpop.permute.xlu0 %684
    %v687 = vmul.f32 %v681, %v685
    %689 = vrot.lane.b32.xlu0 %v687, 32
    %v690 = vpop.permute.xlu0 %689
    %v692 = vadd.f32 %v682, %v690
    %v693 = vtanh.pop %v692
    %695 = vrot.lane.b32.xlu0 %v693, 32
    %v696 = vpop.permute.xlu0 %695
    %v698 = vmul.f32 %v681, %v696
    %v699 = vld [vmem:[#allocation2 + $0x28] sm:$0xff]
    %701 = vrot.lane.b32.xlu0 %v698, 64
    %v702 = vpop.permute.xlu0 %701
    %v703 = vsel %vm203, %v702, 0
    %705 = vmatprep.subr.mxu0 0.0
    %706 = vmatpush1.msra.mxu0 0.0
    %707 = vmatprep.subr.mxu0 0.0
    %708 = vmatpush1.msra.mxu0 0.0
    %709 = vmatprep.subr.mxu0 0.0
    %710 = vmatpush1.msra.mxu0 0.0
    %711 = vmatprep.subr.mxu0 0.0
    %712 = vmatpush1.msra.mxu0 0.0
    %713 = vmatprep.subr.mxu0 0.0
    %714 = vmatpush1.msra.mxu0 0.0
    %715 = vmatprep.subr.mxu0 0.0
    %716 = vmatpush1.msra.mxu0 0.0
    %717 = vmatprep.subr.mxu0 0.0
    %718 = vmatpush1.msra.mxu0 0.0
    %719 = vmatprep.subr.mxu0 0.0
    %720 = vmatpush1.msra.mxu0 0.0
    %721 = vmatprep.subr.mxu0 0.0
    %722 = vmatpush1.msra.mxu0 0.0
    %723 = vmatprep.subr.mxu0 0.0
    %724 = vmatpush1.msra.mxu0 0.0
    %725 = vmatprep.subr.mxu0 0.0
    %726 = vmatpush1.msra.mxu0 0.0
    %727 = vmatprep.subr.mxu0 0.0
    %728 = vmatpush1.msra.mxu0 0.0
    %729 = vmatprep.subr.mxu0 0.0
    %730 = vmatpush1.msra.mxu0 %v199
    %731 = vmatprep.subr.mxu0 0.0
    %732 = vmatpush1.msra.mxu0 %v198
    %733 = vmatprep.subr.mxu0 0.0
    %734 = vmatpush1.msra.mxu0 %v197
    %735 = vmatprep.subr.mxu0 0.0
    %736 = vmatpush1.msra.mxu0 %v196
    %737 = vmatprep.subr.mxu0 0.0
    %738 = vmatpush2.msra.mxu0 0.0
    %739 = vmatprep.subr.mxu0 0.0
    %740 = vmatpush2.msra.mxu0 0.0
    %741 = vmatprep.subr.mxu0 0.0
    %742 = vmatpush2.msra.mxu0 0.0
    %743 = vmatprep.subr.mxu0 0.0
    %744 = vmatpush2.msra.mxu0 0.0
    %745 = vmatprep.subr.mxu0 0.0
    %746 = vmatpush2.msra.mxu0 0.0
    %747 = vmatprep.subr.mxu0 0.0
    %748 = vmatpush2.msra.mxu0 0.0
    %749 = vmatprep.subr.mxu0 0.0
    %750 = vmatpush2.msra.mxu0 0.0
    %751 = vmatprep.subr.mxu0 0.0
    %752 = vmatpush2.msra.mxu0 0.0
    %753 = vmatprep.subr.mxu0 0.0
    %754 = vmatpush2.msra.mxu0 0.0
    %755 = vmatprep.subr.mxu0 0.0
    %756 = vmatpush2.msra.mxu0 0.0
    %757 = vmatprep.subr.mxu0 0.0
    %758 = vmatpush2.msra.mxu0 0.0
    %759 = vmatprep.subr.mxu0 0.0
    %760 = vmatpush2.msra.mxu0 0.0
    %761 = vmatprep.subr.mxu0 0.0
    %762 = vmatpush2.msra.mxu0 0.0
    %763 = vmatprep.subr.mxu0 0.0
    %764 = vmatpush2.msra.mxu0 0.0
    %765 = vmatprep.subr.mxu0 0.0
    %766 = vmatpush2.msra.mxu0 0.0
    %767 = vmatprep.subr.mxu0 0.0
    %768 = vmatpush2.msra.mxu0 0.0
    %769 = vmatprep.mubr.f32.mxu0 0.0
    %770 = vmatmul.mubr.f32.gmra.mxu0 %v703
    %v771 = vpop.f32.mrf.mxu0
    %v772 = vadd.f32 0.0, %v771
    %v773 = vpop.f32.mrf.mxu0
    %774 = vdwg.mxu0
    %v775 = vadd.f32 %v699, %v772
    %v776 = vmul.f32 %v775, %v281
    %v777 = vtanh.pop %v776
    %v778 = vmul.f32 %v777, %v281
    %v779 = vadd.f32 %v778, %v288
    %v780 = vmul.f32 %v779, %v692
    %782 = vrot.lane.b32.xlu0 %v779, 32
    %v783 = vpop.permute.xlu0 %782
    %v785 = vmul.f32 %v779, %v783
    %787 = vrot.lane.b32.xlu0 %v785, 32
    %v788 = vpop.permute.xlu0 %787
    %v790 = vadd.f32 %v780, %v788
    %v791 = vtanh.pop %v790
    %793 = vrot.lane.b32.xlu0 %v791, 32
    %v794 = vpop.permute.xlu0 %793
    %v796 = vmul.f32 %v779, %v794
    %v797 = vld [vmem:[#allocation2 + $0x30] sm:$0xff]
    %799 = vrot.lane.b32.xlu0 %v796, 64
    %v800 = vpop.permute.xlu0 %799
    %v801 = vsel %vm203, %v800, 0
    %803 = vmatprep.subr.mxu0 0.0
    %804 = vmatpush1.msra.mxu0 0.0
    %805 = vmatprep.subr.mxu0 0.0
    %806 = vmatpush1.msra.mxu0 0.0
    %807 = vmatprep.subr.mxu0 0.0
    %808 = vmatpush1.msra.mxu0 0.0
    %809 = vmatprep.subr.mxu0 0.0
    %810 = vmatpush1.msra.mxu0 0.0
    %811 = vmatprep.subr.mxu0 0.0
    %812 = vmatpush1.msra.mxu0 0.0
    %813 = vmatprep.subr.mxu0 0.0
    %814 = vmatpush1.msra.mxu0 0.0
    %815 = vmatprep.subr.mxu0 0.0
    %816 = vmatpush1.msra.mxu0 0.0
    %817 = vmatprep.subr.mxu0 0.0
    %818 = vmatpush1.msra.mxu0 0.0
    %819 = vmatprep.subr.mxu0 0.0
    %820 = vmatpush1.msra.mxu0 0.0
    %821 = vmatprep.subr.mxu0 0.0
    %822 = vmatpush1.msra.mxu0 0.0
    %823 = vmatprep.subr.mxu0 0.0
    %824 = vmatpush1.msra.mxu0 0.0
    %825 = vmatprep.subr.mxu0 0.0
    %826 = vmatpush1.msra.mxu0 0.0
    %827 = vmatprep.subr.mxu0 0.0
    %828 = vmatpush1.msra.mxu0 %v199
    %829 = vmatprep.subr.mxu0 0.0
    %830 = vmatpush1.msra.mxu0 %v198
    %831 = vmatprep.subr.mxu0 0.0
    %832 = vmatpush1.msra.mxu0 %v197
    %833 = vmatprep.subr.mxu0 0.0
    %834 = vmatpush1.msra.mxu0 %v196
    %835 = vmatprep.subr.mxu0 0.0
    %836 = vmatpush2.msra.mxu0 0.0
    %837 = vmatprep.subr.mxu0 0.0
    %838 = vmatpush2.msra.mxu0 0.0
    %839 = vmatprep.subr.mxu0 0.0
    %840 = vmatpush2.msra.mxu0 0.0
    %841 = vmatprep.subr.mxu0 0.0
    %842 = vmatpush2.msra.mxu0 0.0
    %843 = vmatprep.subr.mxu0 0.0
    %844 = vmatpush2.msra.mxu0 0.0
    %845 = vmatprep.subr.mxu0 0.0
    %846 = vmatpush2.msra.mxu0 0.0
    %847 = vmatprep.subr.mxu0 0.0
    %848 = vmatpush2.msra.mxu0 0.0
    %849 = vmatprep.subr.mxu0 0.0
    %850 = vmatpush2.msra.mxu0 0.0
    %851 = vmatprep.subr.mxu0 0.0
    %852 = vmatpush2.msra.mxu0 0.0
    %853 = vmatprep.subr.mxu0 0.0
    %854 = vmatpush2.msra.mxu0 0.0
    %855 = vmatprep.subr.mxu0 0.0
    %856 = vmatpush2.msra.mxu0 0.0
    %857 = vmatprep.subr.mxu0 0.0
    %858 = vmatpush2.msra.mxu0 0.0
    %859 = vmatprep.subr.mxu0 0.0
    %860 = vmatpush2.msra.mxu0 0.0
    %861 = vmatprep.subr.mxu0 0.0
    %862 = vmatpush2.msra.mxu0 0.0
    %863 = vmatprep.subr.mxu0 0.0
    %864 = vmatpush2.msra.mxu0 0.0
    %865 = vmatprep.subr.mxu0 0.0
    %866 = vmatpush2.msra.mxu0 0.0
    %867 = vmatprep.mubr.f32.mxu0 0.0
    %868 = vmatmul.mubr.f32.gmra.mxu0 %v801
    %v869 = vpop.f32.mrf.mxu0
    %v870 = vadd.f32 0.0, %v869
    %v871 = vpop.f32.mrf.mxu0
    %872 = vdwg.mxu0
    %v873 = vadd.f32 %v797, %v870
    %v874 = vmul.f32 %v873, %v281
    %v875 = vtanh.pop %v874
    %v876 = vmul.f32 %v875, %v281
    %v877 = vadd.f32 %v876, %v288
    %v878 = vmul.f32 %v877, %v790
    %880 = vrot.lane.b32.xlu0 %v877, 32
    %v881 = vpop.permute.xlu0 %880
    %v883 = vmul.f32 %v877, %v881
    %885 = vrot.lane.b32.xlu0 %v883, 32
    %v886 = vpop.permute.xlu0 %885
    %v888 = vadd.f32 %v878, %v886
    %v889 = vtanh.pop %v888
    %891 = vrot.lane.b32.xlu0 %v889, 32
    %v892 = vpop.permute.xlu0 %891
    %v894 = vmul.f32 %v877, %v892
    %v895 = vld [vmem:[#allocation2 + $0x38] sm:$0xff]
    %897 = vrot.lane.b32.xlu0 %v894, 64
    %v898 = vpop.permute.xlu0 %897
    %v899 = vsel %vm203, %v898, 0
    %901 = vmatprep.subr.mxu0 0.0
    %902 = vmatpush1.msra.mxu0 0.0
    %903 = vmatprep.subr.mxu0 0.0
    %904 = vmatpush1.msra.mxu0 0.0
    %905 = vmatprep.subr.mxu0 0.0
    %906 = vmatpush1.msra.mxu0 0.0
    %907 = vmatprep.subr.mxu0 0.0
    %908 = vmatpush1.msra.mxu0 0.0
    %909 = vmatprep.subr.mxu0 0.0
    %910 = vmatpush1.msra.mxu0 0.0
    %911 = vmatprep.subr.mxu0 0.0
    %912 = vmatpush1.msra.mxu0 0.0
    %913 = vmatprep.subr.mxu0 0.0
    %914 = vmatpush1.msra.mxu0 0.0
    %915 = vmatprep.subr.mxu0 0.0
    %916 = vmatpush1.msra.mxu0 0.0
    %917 = vmatprep.subr.mxu0 0.0
    %918 = vmatpush1.msra.mxu0 0.0
    %919 = vmatprep.subr.mxu0 0.0
    %920 = vmatpush1.msra.mxu0 0.0
    %921 = vmatprep.subr.mxu0 0.0
    %922 = vmatpush1.msra.mxu0 0.0
    %923 = vmatprep.subr.mxu0 0.0
    %924 = vmatpush1.msra.mxu0 0.0
    %925 = vmatprep.subr.mxu0 0.0
    %926 = vmatpush1.msra.mxu0 %v199
    %927 = vmatprep.subr.mxu0 0.0
    %928 = vmatpush1.msra.mxu0 %v198
    %929 = vmatprep.subr.mxu0 0.0
    %930 = vmatpush1.msra.mxu0 %v197
    %931 = vmatprep.subr.mxu0 0.0
    %932 = vmatpush1.msra.mxu0 %v196
    %933 = vmatprep.subr.mxu0 0.0
    %934 = vmatpush2.msra.mxu0 0.0
    %935 = vmatprep.subr.mxu0 0.0
    %936 = vmatpush2.msra.mxu0 0.0
    %937 = vmatprep.subr.mxu0 0.0
    %938 = vmatpush2.msra.mxu0 0.0
    %939 = vmatprep.subr.mxu0 0.0
    %940 = vmatpush2.msra.mxu0 0.0
    %941 = vmatprep.subr.mxu0 0.0
    %942 = vmatpush2.msra.mxu0 0.0
    %943 = vmatprep.subr.mxu0 0.0
    %944 = vmatpush2.msra.mxu0 0.0
    %945 = vmatprep.subr.mxu0 0.0
    %946 = vmatpush2.msra.mxu0 0.0
    %947 = vmatprep.subr.mxu0 0.0
    %948 = vmatpush2.msra.mxu0 0.0
    %949 = vmatprep.subr.mxu0 0.0
    %950 = vmatpush2.msra.mxu0 0.0
    %951 = vmatprep.subr.mxu0 0.0
    %952 = vmatpush2.msra.mxu0 0.0
    %953 = vmatprep.subr.mxu0 0.0
    %954 = vmatpush2.msra.mxu0 0.0
    %955 = vmatprep.subr.mxu0 0.0
    %956 = vmatpush2.msra.mxu0 0.0
    %957 = vmatprep.subr.mxu0 0.0
    %958 = vmatpush2.msra.mxu0 0.0
    %959 = vmatprep.subr.mxu0 0.0
    %960 = vmatpush2.msra.mxu0 0.0
    %961 = vmatprep.subr.mxu0 0.0
    %962 = vmatpush2.msra.mxu0 0.0
    %963 = vmatprep.subr.mxu0 0.0
    %964 = vmatpush2.msra.mxu0 0.0
    %965 = vmatprep.mubr.f32.mxu0 0.0
    %966 = vmatmul.mubr.f32.gmra.mxu0 %v899
    %v967 = vpop.f32.mrf.mxu0
    %v968 = vadd.f32 0.0, %v967
    %v969 = vpop.f32.mrf.mxu0
    %970 = vdwg.mxu0
    %v971 = vadd.f32 %v895, %v968
    %v972 = vmul.f32 %v971, %v281
    %v973 = vtanh.pop %v972
    %v974 = vmul.f32 %v973, %v281
    %v975 = vadd.f32 %v974, %v288
    %v976 = vmul.f32 %v975, %v888
    %978 = vrot.lane.b32.xlu0 %v975, 32
    %v979 = vpop.permute.xlu0 %978
    %v981 = vmul.f32 %v975, %v979
    %983 = vrot.lane.b32.xlu0 %v981, 32
    %v984 = vpop.permute.xlu0 %983
    %v986 = vadd.f32 %v976, %v984
    %v987 = vtanh.pop %v986
    %989 = vrot.lane.b32.xlu0 %v987, 32
    %v990 = vpop.permute.xlu0 %989
    %v992 = vmul.f32 %v975, %v990
    %994 = vrot.lane.b32.xlu0 %v992, 64
    %v995 = vpop.permute.xlu0 %994
    %v997 = vsel %vm203, %v995, 0.0
    %998 = vadd.xlane.f32.xlu0 %v997
    %v999 = vpop.xlane.xlu0 %998
    %v1000 = vmul.f32 %v992, %v992
    %1002 = vrot.lane.b32.xlu0 %v1000, 64
    %v1003 = vpop.permute.xlu0 %1002
    %v1005 = vsel %vm203, %v1003, 0.0
    %1006 = vadd.xlane.f32.xlu0 %v1005
    %v1007 = vpop.xlane.xlu0 %1006
    %v1008 = vmul.f32 %v999, 0.03125
    %v1009 = vmul.f32 %v1007, 0.03125
    %v1010 = vmul.f32 %v1008, %v1008
    %v1011 = vsub.f32 %v1009, %v1010
    %v1012 = vsub.f32 %v992, %v1008
    %v1013 = vadd.f32 %v1011, 1e-05
    %v1014 = vrsqrt.pop %v1013
    %v1015 = vmul.f32 %v1012, %v1014
    %v1016 = vld [vmem:[%s5] sm:$0x1]
    %v1018 = vlaneseq
    %v1019 = vshrl.u32 %v1018, 7
    %v1020 = vsub.s32 0, %v1019
    %v1021 = vrot.slane %v1016, %v1020
    %1022 = vrot.lane.b32.xlu0 %v1021, 64
    %v1023 = vpop.permute.xlu0 %1022
    %v1025 = vmul.f32 %v1015, %v1023
    %v1026 = vld [vmem:[%s6] sm:$0x1]
    %v1028 = vlaneseq
    %v1029 = vshrl.u32 %v1028, 7
    %v1030 = vsub.s32 0, %v1029
    %v1031 = vrot.slane %v1026, %v1030
    %1032 = vrot.lane.b32.xlu0 %v1031, 64
    %v1033 = vpop.permute.xlu0 %1032
    %v1035 = vadd.f32 %v1025, %v1033
    %v1036 = vld [vmem:[%s9] sm:$0x3]
    %1038 = vrot.lane.b32.xlu0 %v1035, 64
    %v1039 = vpop.permute.xlu0 %1038
    %vm1041 = vcmask 64512
    %v1043 = vsel %vm1041, %v1036, 0
    %1045 = vmatprep.subr.mxu0 0.0
    %1046 = vmatpush1.msra.mxu0 0.0
    %1047 = vmatprep.subr.mxu0 0.0
    %1048 = vmatpush1.msra.mxu0 0.0
    %1049 = vmatprep.subr.mxu0 0.0
    %1050 = vmatpush1.msra.mxu0 0.0
    %1051 = vmatprep.subr.mxu0 0.0
    %1052 = vmatpush1.msra.mxu0 0.0
    %1053 = vmatprep.subr.mxu0 0.0
    %1054 = vmatpush1.msra.mxu0 0.0
    %1055 = vmatprep.subr.mxu0 0.0
    %1056 = vmatpush1.msra.mxu0 0.0
    %1057 = vmatprep.subr.mxu0 0.0
    %1058 = vmatpush1.msra.mxu0 0.0
    %1059 = vmatprep.subr.mxu0 0.0
    %1060 = vmatpush1.msra.mxu0 0.0
    %1061 = vmatprep.subr.mxu0 0.0
    %1062 = vmatpush1.msra.mxu0 0.0
    %1063 = vmatprep.subr.mxu0 0.0
    %1064 = vmatpush1.msra.mxu0 0.0
    %1065 = vmatprep.subr.mxu0 0.0
    %1066 = vmatpush1.msra.mxu0 0.0
    %1067 = vmatprep.subr.mxu0 0.0
    %1068 = vmatpush1.msra.mxu0 0.0
    %1069 = vmatprep.subr.mxu0 0.0
    %1070 = vmatpush1.msra.mxu0 0.0
    %1071 = vmatprep.subr.mxu0 0.0
    %1072 = vmatpush1.msra.mxu0 0.0
    %1073 = vmatprep.subr.mxu0 0.0
    %1074 = vmatpush1.msra.mxu0 0.0
    %1075 = vmatprep.subr.mxu0 0.0
    %1076 = vmatpush1.msra.mxu0 %v1039
    %1077 = vmatprep.subr.mxu0 0.0
    %1078 = vmatpush2.msra.mxu0 0.0
    %1079 = vmatprep.subr.mxu0 0.0
    %1080 = vmatpush2.msra.mxu0 0.0
    %1081 = vmatprep.subr.mxu0 0.0
    %1082 = vmatpush2.msra.mxu0 0.0
    %1083 = vmatprep.subr.mxu0 0.0
    %1084 = vmatpush2.msra.mxu0 0.0
    %1085 = vmatprep.subr.mxu0 0.0
    %1086 = vmatpush2.msra.mxu0 0.0
    %1087 = vmatprep.subr.mxu0 0.0
    %1088 = vmatpush2.msra.mxu0 0.0
    %1089 = vmatprep.subr.mxu0 0.0
    %1090 = vmatpush2.msra.mxu0 0.0
    %1091 = vmatprep.subr.mxu0 0.0
    %1092 = vmatpush2.msra.mxu0 0.0
    %1093 = vmatprep.subr.mxu0 0.0
    %1094 = vmatpush2.msra.mxu0 0.0
    %1095 = vmatprep.subr.mxu0 0.0
    %1096 = vmatpush2.msra.mxu0 0.0
    %1097 = vmatprep.subr.mxu0 0.0
    %1098 = vmatpush2.msra.mxu0 0.0
    %1099 = vmatprep.subr.mxu0 0.0
    %1100 = vmatpush2.msra.mxu0 0.0
    %1101 = vmatprep.subr.mxu0 0.0
    %1102 = vmatpush2.msra.mxu0 0.0
    %1103 = vmatprep.subr.mxu0 0.0
    %1104 = vmatpush2.msra.mxu0 0.0
    %1105 = vmatprep.subr.mxu0 0.0
    %1106 = vmatpush2.msra.mxu0 0.0
    %1107 = vmatprep.subr.mxu0 0.0
    %1108 = vmatpush2.msra.mxu0 0.0
    %1109 = vmatprep.mubr.f32.mxu0 0.0
    %1110 = vmatmul.mubr.f32.gmra.mxu0 %v1043
    %v1111 = vpop.f32.mrf.mxu0
    %v1112 = vadd.f32 0.0, %v1111
    %v1113 = vpop.f32.mrf.mxu0
    %1114 = vdwg.mxu0
    %v1115 = vld [vmem:[%s7] sm:$0xff]
    %v1116 = vld [vmem:[%s7 + $0x8] sm:$0xff]
    %v1117 = vld [vmem:[%s7 + $0x10] sm:$0xff]
    %v1118 = vld [vmem:[%s7 + $0x18] sm:$0xff]
    %v1119 = vld [vmem:[%s8] sm:$0x1]
    %v1121 = vlaneseq
    %v1122 = vshrl.u32 %v1121, 7
    %v1123 = vsub.s32 0, %v1122
    %v1124 = vrot.slane %v1119, %v1123
    %v1127 = vsel %vm203, %v1112, 0
    %1129 = vmatprep.subr.mxu0 0.0
    %1130 = vmatpush1.msra.mxu0 0.0
    %1131 = vmatprep.subr.mxu0 0.0
    %1132 = vmatpush1.msra.mxu0 0.0
    %1133 = vmatprep.subr.mxu0 0.0
    %1134 = vmatpush1.msra.mxu0 0.0
    %1135 = vmatprep.subr.mxu0 0.0
    %1136 = vmatpush1.msra.mxu0 0.0
    %1137 = vmatprep.subr.mxu0 0.0
    %1138 = vmatpush1.msra.mxu0 0.0
    %1139 = vmatprep.subr.mxu0 0.0
    %1140 = vmatpush1.msra.mxu0 0.0
    %1141 = vmatprep.subr.mxu0 0.0
    %1142 = vmatpush1.msra.mxu0 0.0
    %1143 = vmatprep.subr.mxu0 0.0
    %1144 = vmatpush1.msra.mxu0 0.0
    %1145 = vmatprep.subr.mxu0 0.0
    %1146 = vmatpush1.msra.mxu0 0.0
    %1147 = vmatprep.subr.mxu0 0.0
    %1148 = vmatpush1.msra.mxu0 0.0
    %1149 = vmatprep.subr.mxu0 0.0
    %1150 = vmatpush1.msra.mxu0 0.0
    %1151 = vmatprep.subr.mxu0 0.0
    %1152 = vmatpush1.msra.mxu0 0.0
    %1153 = vmatprep.subr.mxu0 0.0
    %1154 = vmatpush1.msra.mxu0 %v1118
    %1155 = vmatprep.subr.mxu0 0.0
    %1156 = vmatpush1.msra.mxu0 %v1117
    %1157 = vmatprep.subr.mxu0 0.0
    %1158 = vmatpush1.msra.mxu0 %v1116
    %1159 = vmatprep.subr.mxu0 0.0
    %1160 = vmatpush1.msra.mxu0 %v1115
    %1161 = vmatprep.subr.mxu0 0.0
    %1162 = vmatpush2.msra.mxu0 0.0
    %1163 = vmatprep.subr.mxu0 0.0
    %1164 = vmatpush2.msra.mxu0 0.0
    %1165 = vmatprep.subr.mxu0 0.0
    %1166 = vmatpush2.msra.mxu0 0.0
    %1167 = vmatprep.subr.mxu0 0.0
    %1168 = vmatpush2.msra.mxu0 0.0
    %1169 = vmatprep.subr.mxu0 0.0
    %1170 = vmatpush2.msra.mxu0 0.0
    %1171 = vmatprep.subr.mxu0 0.0
    %1172 = vmatpush2.msra.mxu0 0.0
    %1173 = vmatprep.subr.mxu0 0.0
    %1174 = vmatpush2.msra.mxu0 0.0
    %1175 = vmatprep.subr.mxu0 0.0
    %1176 = vmatpush2.msra.mxu0 0.0
    %1177 = vmatprep.subr.mxu0 0.0
    %1178 = vmatpush2.msra.mxu0 0.0
    %1179 = vmatprep.subr.mxu0 0.0
    %1180 = vmatpush2.msra.mxu0 0.0
    %1181 = vmatprep.subr.mxu0 0.0
    %1182 = vmatpush2.msra.mxu0 0.0
    %1183 = vmatprep.subr.mxu0 0.0
    %1184 = vmatpush2.msra.mxu0 0.0
    %1185 = vmatprep.subr.mxu0 0.0
    %1186 = vmatpush2.msra.mxu0 0.0
    %1187 = vmatprep.subr.mxu0 0.0
    %1188 = vmatpush2.msra.mxu0 0.0
    %1189 = vmatprep.subr.mxu0 0.0
    %1190 = vmatpush2.msra.mxu0 0.0
    %1191 = vmatprep.subr.mxu0 0.0
    %1192 = vmatpush2.msra.mxu0 0.0
    %1193 = vmatprep.mubr.f32.mxu0 0.0
    %1194 = vmatmul.mubr.f32.gmra.mxu0 %v1127
    %v1195 = vpop.f32.mrf.mxu0
    %v1196 = vadd.f32 %v1124, %v1195
    %v1197 = vpop.f32.mrf.mxu0
    %1198 = vdwg.mxu0
    %v1199 = vld [vmem:[%s10] sm:$0x3]
    %v1200 = vmul.f32 %v1196, 0.5
    %v1201 = vmul.f32 %v1200, 1.442695
    %v1202 = vpow.pop %v1201
    %1204 = vrot.lane.b32.xlu0 %v1202, 112
    %v1205 = vpop.permute.xlu0 %1204
    %v1207 = vmul.f32 %v1199, %v1205
    %v1208 = vadd.f32 %v1196, %v1207
    %vm1209 = vcmask 123904
    %1210 = vst.msk [vmem:[#allocation3] sm:$0x3] %vm1209, %v1208
    %vm1211 = vcmask 254976
    %1212 = vst.msk [vmem:[%s12] sm:$0x3] %vm1211, %v1196
    // Predicated region
    $region46: #{character_net_forward.1} parent=1 // pred_check
      _
    $region47: #{character_net_forward.1} parent=1 // pred_check_branch
      %1214 = sbr.rel (0) target = $region49
    $region48: #{character_net_forward.1} parent=1 // pred_region
      %s1216 = ssub.s32 32, 32
      %1217 = vsyncadd [#allocation4], %s1216
      %s1219 = sshll.u32 [#allocation3], 4
      %s1220 = int_to_ptr.vmem [resolvable:$true] %s1219
      %1222 = dma.vmem_to_hbm [thread:$0]  %s1220, 32, %s11, [#allocation4]
    $region49: #{character_net_forward.1} parent=1 // pred_fallthru
      _
    // Predicated region
    $region50: #{character_net_forward.1} parent=1 // pred_check
      _
    $region51: #{character_net_forward.1} parent=1 // pred_check_branch
      %1224 = sbr.rel (0) target = $region53
    $region52: #{character_net_forward.1} parent=1 // pred_region
      _
    $region53: #{character_net_forward.1} parent=1 // pred_fallthru
      _
    // Predicated region
    $region54: #{character_net_forward.1} parent=1 // pred_check
      _
    $region55: #{character_net_forward.1} parent=1 // pred_check_branch
      %1226 = sbr.rel (0) target = $region57
    $region56: #{character_net_forward.1} parent=1 // pred_region
      %1227 = dma.done [#allocation4], 32
    $region57: #{character_net_forward.1} parent=1 // pred_fallthru
      _
    // Predicated region
    $region58: #{character_net_forward.1} parent=1 // pred_check
      _
    $region59: #{character_net_forward.1} parent=1 // pred_check_branch
      %1229 = sbr.rel (0) target = $region61
    $region60: #{character_net_forward.1} parent=1 // pred_region
      _
    $region61: #{character_net_forward.1} parent=1 // pred_fallthru
      _
    %1230 = vsyncpa [#allocation4], 1

</llo_original>
